<compile_context>
chip_gen: v7x
topology: tpu7x:2x2x1
jax: 0.10.0
libtpu: 0.0.40
codegen_flags: <defaults>
</compile_context>

<pallas_src>
import functools

import jax
import jax.numpy as jnp
from jax.experimental import pallas as pl
from jax.experimental.pallas import tpu as pltpu


def _number_embedding_kernel(idx_ref,                      # SMEM scalar prefetch (Bp,)
                             emb_hbm,                      # HBM (V, dim)
                             w1_ref, b1_ref, w2_ref, b2_ref,
                             res_ref, embed_ref,           # outputs (bb, Vp), (bb, dim)
                             x_buf, copy_sems):            # scratch
    i = pl.program_id(0)
    bb, dim = x_buf.shape
    base = i * bb

    # ---- embedding gather: one row DMA per batch element (table stays in HBM) ----
    for r in range(bb):                                    # bb is a compile-time const
        row = idx_ref[base + r]
        pltpu.make_async_copy(emb_hbm.at[row], x_buf.at[r], copy_sems.at[r]).start()
    for r in range(bb):
        pltpu.make_async_copy(emb_hbm.at[0], x_buf.at[r], copy_sems.at[r]).wait()

    inpt = x_buf[...].astype(jnp.float32)                  # (bb, dim)

    # ---- linear1 + ReLU ----
    h = jnp.dot(inpt, w1_ref[...], preferred_element_type=jnp.float32) + b1_ref[...]
    embed = jnp.maximum(h, 0.0)                            # (bb, dim)
    embed_ref[...] = embed.astype(embed_ref.dtype)

    # ---- linear2 + softmax over the (lane-padded) class axis ----
    # Padded logit columns carry bias -inf -> exp() == 0, so they never
    # contaminate the row max / sum.
    logits = jnp.dot(embed, w2_ref[...], preferred_element_type=jnp.float32) + b2_ref[...]
    m = jnp.max(logits, axis=1, keepdims=True)
    e = jnp.exp(logits - m)
    denom = jnp.sum(e, axis=1, keepdims=True)
    res_ref[...] = (e * pl.reciprocal(denom, approx=True)).astype(res_ref.dtype)


def number_embedding_forward(x_idx, emb_table, w1, b1, w2, b2, *, b_block=128):
    """x_idx: (B,) int indices.  Returns (res, embed) like the torch module.

    w1: (dim, dim), w2: (dim, output_size)  -- i.e. torch weights pre-transposed.
    b_block: batch tile height (use 128/256 to fill MXU rows on real batches).
    """
    B = x_idx.shape[0]
    output_size, dim = emb_table.shape
    LANE = 128

    # Lane-dense padded class width (e.g. 600 -> 640).
    vp = pl.cdiv(output_size, LANE) * LANE

    # Clamp indices: an OOB index must not turn into an OOB HBM DMA.
    idx = jnp.clip(x_idx.astype(jnp.int32), 0, output_size - 1)

    # Pad the batch to a multiple of the batch tile.
    b_block = min(b_block, max(8, pl.cdiv(B, 8) * 8))
    bp = pl.cdiv(B, b_block) * b_block
    if bp != B:
        idx = jnp.pad(idx, (0, bp - B))

    # Pad w2 / b2 to the lane-dense width; padded logits get bias -inf.
    if vp != output_size:
        w2p = jnp.pad(w2, ((0, 0), (0, vp - output_size)))
        b2p = jnp.pad(b2, (0, vp - output_size), constant_values=-jnp.inf)
    else:
        w2p, b2p = w2, b2
    b1_2d = b1.reshape(1, dim)
    b2_2d = b2p.reshape(1, vp)

    n_blocks = bp // b_block

    grid_spec = pltpu.PrefetchScalarGridSpec(
        num_scalar_prefetch=1,
        grid=(n_blocks,),
        in_specs=[
            pl.BlockSpec(memory_space=pl.ANY),                       # emb_table (HBM)
            pl.BlockSpec((dim, dim), lambda i, idx_ref: (0, 0)),     # w1 (resident)
            pl.BlockSpec((1, dim),   lambda i, idx_ref: (0, 0)),     # b1 (resident)
            pl.BlockSpec((dim, vp),  lambda i, idx_ref: (0, 0)),     # w2 (resident)
            pl.BlockSpec((1, vp),    lambda i, idx_ref: (0, 0)),     # b2 (resident)
        ],
        out_specs=(
            pl.BlockSpec((b_block, vp),  lambda i, idx_ref: (i, 0)),  # res
            pl.BlockSpec((b_block, dim), lambda i, idx_ref: (i, 0)),  # embed
        ),
        scratch_shapes=[
            pltpu.VMEM((b_block, dim), emb_table.dtype),              # gathered rows
            pltpu.SemaphoreType.DMA((b_block,)),                      # one sem per row
        ],
    )

    res_p, embed_p = pl.pallas_call(
        _number_embedding_kernel,
        out_shape=(
            jax.ShapeDtypeStruct((bp, vp), jnp.float32),
            jax.ShapeDtypeStruct((bp, dim), jnp.float32),
        ),
        grid_spec=grid_spec,
        compiler_params=pltpu.CompilerParams(
            dimension_semantics=("parallel",),        # megacore-shardable batch axis
            vmem_limit_bytes=32 * 1024 * 1024,
        ),
    )(idx, emb_table, w1, b1_2d, w2p, b2_2d)

    # Strip batch / lane padding.
    return res_p[:B, :output_size], embed_p[:B, :dim]


if __name__ == "__main__":
    dim = 128
    output_size = 600
    B = 13          # deliberately ragged: exercises batch padding + 2-step grid

    key = jax.random.PRNGKey(0)
    k_emb, k_w1, k_b1, k_w2, k_b2, k_x = jax.random.split(key, 6)

    # Deterministic synthetic parameters (shapes match nn.Embedding / nn.Linear).
    emb_table = jax.random.normal(k_emb, (output_size, dim), jnp.float32)
    # torch nn.Linear stores weight as (out, in); we pre-transpose to (in, out).
    w1 = jax.random.normal(k_w1, (dim, dim), jnp.float32) * 0.05
    b1 = jax.random.normal(k_b1, (dim,), jnp.float32) * 0.05
    w2 = jax.random.normal(k_w2, (dim, output_size), jnp.float32) * 0.05
    b2 = jax.random.normal(k_b2, (output_size,), jnp.float32) * 0.05

    x = jax.random.randint(k_x, (B,), 0, output_size, dtype=jnp.int32)

    # Small batch tile for the toy shape; use 128/256 for real batches.
    res, embed = number_embedding_forward(x, emb_table, w1, b1, w2, b2, b_block=8)
    jax.block_until_ready((res, embed))

    # Cheap sanity check against a pure-JAX reference.
    inpt_ref = emb_table[x]
    embed_ref = jnp.maximum(inpt_ref @ w1 + b1, 0.0)
    res_ref = jax.nn.softmax(embed_ref @ w2 + b2, axis=1)
    assert embed.shape == (B, dim) and res.shape == (B, output_size)
    assert jnp.allclose(embed, embed_ref, atol=1e-4, rtol=1e-4)
    assert jnp.allclose(res, res_ref, atol=1e-3, rtol=1e-3)   # approx reciprocal

    print("KERNEL_OK")
</pallas_src>

<mosaic_0001>
module attributes {stable_mosaic.version = 11 : i64} {
  func.func @_number_embedding_kernel(%arg0: i32, %arg1: memref<16xi32, #tpu.memory_space<smem>>, %arg2: memref<600x128xf32, #tpu.memory_space<any>>, %arg3: memref<128x128xf32, #tpu.memory_space<vmem>>, %arg4: memref<1x128xf32, #tpu.memory_space<vmem>>, %arg5: memref<128x640xf32, #tpu.memory_space<vmem>>, %arg6: memref<1x640xf32, #tpu.memory_space<vmem>>, %arg7: memref<8x640xf32, #tpu.memory_space<vmem>>, %arg8: memref<8x128xf32, #tpu.memory_space<vmem>>, %arg9: memref<8x128xf32, #tpu.memory_space<vmem>>, %arg10: memref<8x!tpu.dma_semaphore, #tpu.memory_space<semaphore_mem>>) attributes {dimension_semantics = [#tpu.dimension_semantics<parallel>], iteration_bounds = array<i64: 2>, scalar_prefetch = 1 : i64, scratch_operands = 2 : i64, tpu.core_type = #tpu.core_type<tc>, window_params = [{}, {pipeline_mode = #tpu.pipeline_mode<synchronous>, transform_indices = @transform_1, window_bounds = array<i64: 128, 128>}, {pipeline_mode = #tpu.pipeline_mode<synchronous>, transform_indices = @transform_2, window_bounds = array<i64: 1, 128>}, {pipeline_mode = #tpu.pipeline_mode<synchronous>, transform_indices = @transform_3, window_bounds = array<i64: 128, 640>}, {pipeline_mode = #tpu.pipeline_mode<synchronous>, transform_indices = @transform_4, window_bounds = array<i64: 1, 640>}, {transform_indices = @transform_5, window_bounds = array<i64: 8, 640>}, {transform_indices = @transform_6, window_bounds = array<i64: 8, 128>}]} {
    %c8_i32 = arith.constant 8 : i32
    %0 = arith.muli %arg0, %c8_i32 : i32
    %c0_i32 = arith.constant 0 : i32
    %1 = arith.addi %0, %c0_i32 : i32
    %2 = arith.index_cast %1 : i32 to index
    %3 = memref.load %arg1[%2] : memref<16xi32, #tpu.memory_space<smem>>
    %c0_i32_0 = arith.constant 0 : i32
    %c0_i32_1 = arith.constant 0 : i32
    %c0_i32_2 = arith.constant 0 : i32
    %4 = tpu.memref_slice %arg2[%3, %c0_i32_2] : memref<600x128xf32, #tpu.memory_space<any>> -> memref<1x128xf32, #tpu.memory_space<any>>
    %5 = tpu.memref_squeeze %4 : memref<1x128xf32, #tpu.memory_space<any>> -> memref<128xf32, #tpu.memory_space<any>>
    %c0_i32_3 = arith.constant 0 : i32
    %6 = tpu.memref_slice %arg9[%c0_i32_0, %c0_i32_3] : memref<8x128xf32, #tpu.memory_space<vmem>> -> memref<1x128xf32, #tpu.memory_space<vmem>>
    %7 = tpu.memref_squeeze %6 : memref<1x128xf32, #tpu.memory_space<vmem>> -> memref<128xf32, #tpu.memory_space<vmem>>
    %8 = tpu.memref_slice %arg10[%c0_i32_1] : memref<8x!tpu.dma_semaphore, #tpu.memory_space<semaphore_mem>> -> memref<1x!tpu.dma_semaphore, #tpu.memory_space<semaphore_mem>>
    %9 = tpu.memref_squeeze %8 : memref<1x!tpu.dma_semaphore, #tpu.memory_space<semaphore_mem>> -> memref<!tpu.dma_semaphore, #tpu.memory_space<semaphore_mem>>
    tpu.enqueue_dma source(%5 : memref<128xf32, #tpu.memory_space<any>>) target(%7 : memref<128xf32, #tpu.memory_space<vmem>>) target_semaphore(%9 : memref<!tpu.dma_semaphore, #tpu.memory_space<semaphore_mem>>)
    %c1_i32 = arith.constant 1 : i32
    %10 = arith.addi %0, %c1_i32 : i32
    %11 = arith.index_cast %10 : i32 to index
    %12 = memref.load %arg1[%11] : memref<16xi32, #tpu.memory_space<smem>>
    %c1_i32_4 = arith.constant 1 : i32
    %c1_i32_5 = arith.constant 1 : i32
    %c0_i32_6 = arith.constant 0 : i32
    %13 = tpu.memref_slice %arg2[%12, %c0_i32_6] : memref<600x128xf32, #tpu.memory_space<any>> -> memref<1x128xf32, #tpu.memory_space<any>>
    %14 = tpu.memref_squeeze %13 : memref<1x128xf32, #tpu.memory_space<any>> -> memref<128xf32, #tpu.memory_space<any>>
    %c0_i32_7 = arith.constant 0 : i32
    %15 = tpu.memref_slice %arg9[%c1_i32_4, %c0_i32_7] : memref<8x128xf32, #tpu.memory_space<vmem>> -> memref<1x128xf32, #tpu.memory_space<vmem>>
    %16 = tpu.memref_squeeze %15 : memref<1x128xf32, #tpu.memory_space<vmem>> -> memref<128xf32, #tpu.memory_space<vmem>>
    %17 = tpu.memref_slice %arg10[%c1_i32_5] : memref<8x!tpu.dma_semaphore, #tpu.memory_space<semaphore_mem>> -> memref<1x!tpu.dma_semaphore, #tpu.memory_space<semaphore_mem>>
    %18 = tpu.memref_squeeze %17 : memref<1x!tpu.dma_semaphore, #tpu.memory_space<semaphore_mem>> -> memref<!tpu.dma_semaphore, #tpu.memory_space<semaphore_mem>>
    tpu.enqueue_dma source(%14 : memref<128xf32, #tpu.memory_space<any>>) target(%16 : memref<128xf32, #tpu.memory_space<vmem>>) target_semaphore(%18 : memref<!tpu.dma_semaphore, #tpu.memory_space<semaphore_mem>>)
    %c2_i32 = arith.constant 2 : i32
    %19 = arith.addi %0, %c2_i32 : i32
    %20 = arith.index_cast %19 : i32 to index
    %21 = memref.load %arg1[%20] : memref<16xi32, #tpu.memory_space<smem>>
    %c2_i32_8 = arith.constant 2 : i32
    %c2_i32_9 = arith.constant 2 : i32
    %c0_i32_10 = arith.constant 0 : i32
    %22 = tpu.memref_slice %arg2[%21, %c0_i32_10] : memref<600x128xf32, #tpu.memory_space<any>> -> memref<1x128xf32, #tpu.memory_space<any>>
    %23 = tpu.memref_squeeze %22 : memref<1x128xf32, #tpu.memory_space<any>> -> memref<128xf32, #tpu.memory_space<any>>
    %c0_i32_11 = arith.constant 0 : i32
    %24 = tpu.memref_slice %arg9[%c2_i32_8, %c0_i32_11] : memref<8x128xf32, #tpu.memory_space<vmem>> -> memref<1x128xf32, #tpu.memory_space<vmem>>
    %25 = tpu.memref_squeeze %24 : memref<1x128xf32, #tpu.memory_space<vmem>> -> memref<128xf32, #tpu.memory_space<vmem>>
    %26 = tpu.memref_slice %arg10[%c2_i32_9] : memref<8x!tpu.dma_semaphore, #tpu.memory_space<semaphore_mem>> -> memref<1x!tpu.dma_semaphore, #tpu.memory_space<semaphore_mem>>
    %27 = tpu.memref_squeeze %26 : memref<1x!tpu.dma_semaphore, #tpu.memory_space<semaphore_mem>> -> memref<!tpu.dma_semaphore, #tpu.memory_space<semaphore_mem>>
    tpu.enqueue_dma source(%23 : memref<128xf32, #tpu.memory_space<any>>) target(%25 : memref<128xf32, #tpu.memory_space<vmem>>) target_semaphore(%27 : memref<!tpu.dma_semaphore, #tpu.memory_space<semaphore_mem>>)
    %c3_i32 = arith.constant 3 : i32
    %28 = arith.addi %0, %c3_i32 : i32
    %29 = arith.index_cast %28 : i32 to index
    %30 = memref.load %arg1[%29] : memref<16xi32, #tpu.memory_space<smem>>
    %c3_i32_12 = arith.constant 3 : i32
    %c3_i32_13 = arith.constant 3 : i32
    %c0_i32_14 = arith.constant 0 : i32
    %31 = tpu.memref_slice %arg2[%30, %c0_i32_14] : memref<600x128xf32, #tpu.memory_space<any>> -> memref<1x128xf32, #tpu.memory_space<any>>
    %32 = tpu.memref_squeeze %31 : memref<1x128xf32, #tpu.memory_space<any>> -> memref<128xf32, #tpu.memory_space<any>>
    %c0_i32_15 = arith.constant 0 : i32
    %33 = tpu.memref_slice %arg9[%c3_i32_12, %c0_i32_15] : memref<8x128xf32, #tpu.memory_space<vmem>> -> memref<1x128xf32, #tpu.memory_space<vmem>>
    %34 = tpu.memref_squeeze %33 : memref<1x128xf32, #tpu.memory_space<vmem>> -> memref<128xf32, #tpu.memory_space<vmem>>
    %35 = tpu.memref_slice %arg10[%c3_i32_13] : memref<8x!tpu.dma_semaphore, #tpu.memory_space<semaphore_mem>> -> memref<1x!tpu.dma_semaphore, #tpu.memory_space<semaphore_mem>>
    %36 = tpu.memref_squeeze %35 : memref<1x!tpu.dma_semaphore, #tpu.memory_space<semaphore_mem>> -> memref<!tpu.dma_semaphore, #tpu.memory_space<semaphore_mem>>
    tpu.enqueue_dma source(%32 : memref<128xf32, #tpu.memory_space<any>>) target(%34 : memref<128xf32, #tpu.memory_space<vmem>>) target_semaphore(%36 : memref<!tpu.dma_semaphore, #tpu.memory_space<semaphore_mem>>)
    %c4_i32 = arith.constant 4 : i32
    %37 = arith.addi %0, %c4_i32 : i32
    %38 = arith.index_cast %37 : i32 to index
    %39 = memref.load %arg1[%38] : memref<16xi32, #tpu.memory_space<smem>>
    %c4_i32_16 = arith.constant 4 : i32
    %c4_i32_17 = arith.constant 4 : i32
    %c0_i32_18 = arith.constant 0 : i32
    %40 = tpu.memref_slice %arg2[%39, %c0_i32_18] : memref<600x128xf32, #tpu.memory_space<any>> -> memref<1x128xf32, #tpu.memory_space<any>>
    %41 = tpu.memref_squeeze %40 : memref<1x128xf32, #tpu.memory_space<any>> -> memref<128xf32, #tpu.memory_space<any>>
    %c0_i32_19 = arith.constant 0 : i32
    %42 = tpu.memref_slice %arg9[%c4_i32_16, %c0_i32_19] : memref<8x128xf32, #tpu.memory_space<vmem>> -> memref<1x128xf32, #tpu.memory_space<vmem>>
    %43 = tpu.memref_squeeze %42 : memref<1x128xf32, #tpu.memory_space<vmem>> -> memref<128xf32, #tpu.memory_space<vmem>>
    %44 = tpu.memref_slice %arg10[%c4_i32_17] : memref<8x!tpu.dma_semaphore, #tpu.memory_space<semaphore_mem>> -> memref<1x!tpu.dma_semaphore, #tpu.memory_space<semaphore_mem>>
    %45 = tpu.memref_squeeze %44 : memref<1x!tpu.dma_semaphore, #tpu.memory_space<semaphore_mem>> -> memref<!tpu.dma_semaphore, #tpu.memory_space<semaphore_mem>>
    tpu.enqueue_dma source(%41 : memref<128xf32, #tpu.memory_space<any>>) target(%43 : memref<128xf32, #tpu.memory_space<vmem>>) target_semaphore(%45 : memref<!tpu.dma_semaphore, #tpu.memory_space<semaphore_mem>>)
    %c5_i32 = arith.constant 5 : i32
    %46 = arith.addi %0, %c5_i32 : i32
    %47 = arith.index_cast %46 : i32 to index
    %48 = memref.load %arg1[%47] : memref<16xi32, #tpu.memory_space<smem>>
    %c5_i32_20 = arith.constant 5 : i32
    %c5_i32_21 = arith.constant 5 : i32
    %c0_i32_22 = arith.constant 0 : i32
    %49 = tpu.memref_slice %arg2[%48, %c0_i32_22] : memref<600x128xf32, #tpu.memory_space<any>> -> memref<1x128xf32, #tpu.memory_space<any>>
    %50 = tpu.memref_squeeze %49 : memref<1x128xf32, #tpu.memory_space<any>> -> memref<128xf32, #tpu.memory_space<any>>
    %c0_i32_23 = arith.constant 0 : i32
    %51 = tpu.memref_slice %arg9[%c5_i32_20, %c0_i32_23] : memref<8x128xf32, #tpu.memory_space<vmem>> -> memref<1x128xf32, #tpu.memory_space<vmem>>
    %52 = tpu.memref_squeeze %51 : memref<1x128xf32, #tpu.memory_space<vmem>> -> memref<128xf32, #tpu.memory_space<vmem>>
    %53 = tpu.memref_slice %arg10[%c5_i32_21] : memref<8x!tpu.dma_semaphore, #tpu.memory_space<semaphore_mem>> -> memref<1x!tpu.dma_semaphore, #tpu.memory_space<semaphore_mem>>
    %54 = tpu.memref_squeeze %53 : memref<1x!tpu.dma_semaphore, #tpu.memory_space<semaphore_mem>> -> memref<!tpu.dma_semaphore, #tpu.memory_space<semaphore_mem>>
    tpu.enqueue_dma source(%50 : memref<128xf32, #tpu.memory_space<any>>) target(%52 : memref<128xf32, #tpu.memory_space<vmem>>) target_semaphore(%54 : memref<!tpu.dma_semaphore, #tpu.memory_space<semaphore_mem>>)
    %c6_i32 = arith.constant 6 : i32
    %55 = arith.addi %0, %c6_i32 : i32
    %56 = arith.index_cast %55 : i32 to index
    %57 = memref.load %arg1[%56] : memref<16xi32, #tpu.memory_space<smem>>
    %c6_i32_24 = arith.constant 6 : i32
    %c6_i32_25 = arith.constant 6 : i32
    %c0_i32_26 = arith.constant 0 : i32
    %58 = tpu.memref_slice %arg2[%57, %c0_i32_26] : memref<600x128xf32, #tpu.memory_space<any>> -> memref<1x128xf32, #tpu.memory_space<any>>
    %59 = tpu.memref_squeeze %58 : memref<1x128xf32, #tpu.memory_space<any>> -> memref<128xf32, #tpu.memory_space<any>>
    %c0_i32_27 = arith.constant 0 : i32
    %60 = tpu.memref_slice %arg9[%c6_i32_24, %c0_i32_27] : memref<8x128xf32, #tpu.memory_space<vmem>> -> memref<1x128xf32, #tpu.memory_space<vmem>>
    %61 = tpu.memref_squeeze %60 : memref<1x128xf32, #tpu.memory_space<vmem>> -> memref<128xf32, #tpu.memory_space<vmem>>
    %62 = tpu.memref_slice %arg10[%c6_i32_25] : memref<8x!tpu.dma_semaphore, #tpu.memory_space<semaphore_mem>> -> memref<1x!tpu.dma_semaphore, #tpu.memory_space<semaphore_mem>>
    %63 = tpu.memref_squeeze %62 : memref<1x!tpu.dma_semaphore, #tpu.memory_space<semaphore_mem>> -> memref<!tpu.dma_semaphore, #tpu.memory_space<semaphore_mem>>
    tpu.enqueue_dma source(%59 : memref<128xf32, #tpu.memory_space<any>>) target(%61 : memref<128xf32, #tpu.memory_space<vmem>>) target_semaphore(%63 : memref<!tpu.dma_semaphore, #tpu.memory_space<semaphore_mem>>)
    %c7_i32 = arith.constant 7 : i32
    %64 = arith.addi %0, %c7_i32 : i32
    %65 = arith.index_cast %64 : i32 to index
    %66 = memref.load %arg1[%65] : memref<16xi32, #tpu.memory_space<smem>>
    %c7_i32_28 = arith.constant 7 : i32
    %c7_i32_29 = arith.constant 7 : i32
    %c0_i32_30 = arith.constant 0 : i32
    %67 = tpu.memref_slice %arg2[%66, %c0_i32_30] : memref<600x128xf32, #tpu.memory_space<any>> -> memref<1x128xf32, #tpu.memory_space<any>>
    %68 = tpu.memref_squeeze %67 : memref<1x128xf32, #tpu.memory_space<any>> -> memref<128xf32, #tpu.memory_space<any>>
    %c0_i32_31 = arith.constant 0 : i32
    %69 = tpu.memref_slice %arg9[%c7_i32_28, %c0_i32_31] : memref<8x128xf32, #tpu.memory_space<vmem>> -> memref<1x128xf32, #tpu.memory_space<vmem>>
    %70 = tpu.memref_squeeze %69 : memref<1x128xf32, #tpu.memory_space<vmem>> -> memref<128xf32, #tpu.memory_space<vmem>>
    %71 = tpu.memref_slice %arg10[%c7_i32_29] : memref<8x!tpu.dma_semaphore, #tpu.memory_space<semaphore_mem>> -> memref<1x!tpu.dma_semaphore, #tpu.memory_space<semaphore_mem>>
    %72 = tpu.memref_squeeze %71 : memref<1x!tpu.dma_semaphore, #tpu.memory_space<semaphore_mem>> -> memref<!tpu.dma_semaphore, #tpu.memory_space<semaphore_mem>>
    tpu.enqueue_dma source(%68 : memref<128xf32, #tpu.memory_space<any>>) target(%70 : memref<128xf32, #tpu.memory_space<vmem>>) target_semaphore(%72 : memref<!tpu.dma_semaphore, #tpu.memory_space<semaphore_mem>>)
    %c0_i32_32 = arith.constant 0 : i32
    %c0_i32_33 = arith.constant 0 : i32
    %c0_i32_34 = arith.constant 0 : i32
    %c0_i32_35 = arith.constant 0 : i32
    %73 = tpu.memref_slice %arg2[%c0_i32_32, %c0_i32_35] : memref<600x128xf32, #tpu.memory_space<any>> -> memref<1x128xf32, #tpu.memory_space<any>>
    %74 = tpu.memref_squeeze %73 : memref<1x128xf32, #tpu.memory_space<any>> -> memref<128xf32, #tpu.memory_space<any>>
    %c0_i32_36 = arith.constant 0 : i32
    %75 = tpu.memref_slice %arg9[%c0_i32_33, %c0_i32_36] : memref<8x128xf32, #tpu.memory_space<vmem>> -> memref<1x128xf32, #tpu.memory_space<vmem>>
    %76 = tpu.memref_squeeze %75 : memref<1x128xf32, #tpu.memory_space<vmem>> -> memref<128xf32, #tpu.memory_space<vmem>>
    %77 = tpu.memref_slice %arg10[%c0_i32_34] : memref<8x!tpu.dma_semaphore, #tpu.memory_space<semaphore_mem>> -> memref<1x!tpu.dma_semaphore, #tpu.memory_space<semaphore_mem>>
    %78 = tpu.memref_squeeze %77 : memref<1x!tpu.dma_semaphore, #tpu.memory_space<semaphore_mem>> -> memref<!tpu.dma_semaphore, #tpu.memory_space<semaphore_mem>>
    tpu.wait_dma2 semaphore(%78 : memref<!tpu.dma_semaphore, #tpu.memory_space<semaphore_mem>>) src(%74 : memref<128xf32, #tpu.memory_space<any>>) dst(%76 : memref<128xf32, #tpu.memory_space<vmem>>)
    %c0_i32_37 = arith.constant 0 : i32
    %c1_i32_38 = arith.constant 1 : i32
    %c1_i32_39 = arith.constant 1 : i32
    %c0_i32_40 = arith.constant 0 : i32
    %79 = tpu.memref_slice %arg2[%c0_i32_37, %c0_i32_40] : memref<600x128xf32, #tpu.memory_space<any>> -> memref<1x128xf32, #tpu.memory_space<any>>
    %80 = tpu.memref_squeeze %79 : memref<1x128xf32, #tpu.memory_space<any>> -> memref<128xf32, #tpu.memory_space<any>>
    %c0_i32_41 = arith.constant 0 : i32
    %81 = tpu.memref_slice %arg9[%c1_i32_38, %c0_i32_41] : memref<8x128xf32, #tpu.memory_space<vmem>> -> memref<1x128xf32, #tpu.memory_space<vmem>>
    %82 = tpu.memref_squeeze %81 : memref<1x128xf32, #tpu.memory_space<vmem>> -> memref<128xf32, #tpu.memory_space<vmem>>
    %83 = tpu.memref_slice %arg10[%c1_i32_39] : memref<8x!tpu.dma_semaphore, #tpu.memory_space<semaphore_mem>> -> memref<1x!tpu.dma_semaphore, #tpu.memory_space<semaphore_mem>>
    %84 = tpu.memref_squeeze %83 : memref<1x!tpu.dma_semaphore, #tpu.memory_space<semaphore_mem>> -> memref<!tpu.dma_semaphore, #tpu.memory_space<semaphore_mem>>
    tpu.wait_dma2 semaphore(%84 : memref<!tpu.dma_semaphore, #tpu.memory_space<semaphore_mem>>) src(%80 : memref<128xf32, #tpu.memory_space<any>>) dst(%82 : memref<128xf32, #tpu.memory_space<vmem>>)
    %c0_i32_42 = arith.constant 0 : i32
    %c2_i32_43 = arith.constant 2 : i32
    %c2_i32_44 = arith.constant 2 : i32
    %c0_i32_45 = arith.constant 0 : i32
    %85 = tpu.memref_slice %arg2[%c0_i32_42, %c0_i32_45] : memref<600x128xf32, #tpu.memory_space<any>> -> memref<1x128xf32, #tpu.memory_space<any>>
    %86 = tpu.memref_squeeze %85 : memref<1x128xf32, #tpu.memory_space<any>> -> memref<128xf32, #tpu.memory_space<any>>
    %c0_i32_46 = arith.constant 0 : i32
    %87 = tpu.memref_slice %arg9[%c2_i32_43, %c0_i32_46] : memref<8x128xf32, #tpu.memory_space<vmem>> -> memref<1x128xf32, #tpu.memory_space<vmem>>
    %88 = tpu.memref_squeeze %87 : memref<1x128xf32, #tpu.memory_space<vmem>> -> memref<128xf32, #tpu.memory_space<vmem>>
    %89 = tpu.memref_slice %arg10[%c2_i32_44] : memref<8x!tpu.dma_semaphore, #tpu.memory_space<semaphore_mem>> -> memref<1x!tpu.dma_semaphore, #tpu.memory_space<semaphore_mem>>
    %90 = tpu.memref_squeeze %89 : memref<1x!tpu.dma_semaphore, #tpu.memory_space<semaphore_mem>> -> memref<!tpu.dma_semaphore, #tpu.memory_space<semaphore_mem>>
    tpu.wait_dma2 semaphore(%90 : memref<!tpu.dma_semaphore, #tpu.memory_space<semaphore_mem>>) src(%86 : memref<128xf32, #tpu.memory_space<any>>) dst(%88 : memref<128xf32, #tpu.memory_space<vmem>>)
    %c0_i32_47 = arith.constant 0 : i32
    %c3_i32_48 = arith.constant 3 : i32
    %c3_i32_49 = arith.constant 3 : i32
    %c0_i32_50 = arith.constant 0 : i32
    %91 = tpu.memref_slice %arg2[%c0_i32_47, %c0_i32_50] : memref<600x128xf32, #tpu.memory_space<any>> -> memref<1x128xf32, #tpu.memory_space<any>>
    %92 = tpu.memref_squeeze %91 : memref<1x128xf32, #tpu.memory_space<any>> -> memref<128xf32, #tpu.memory_space<any>>
    %c0_i32_51 = arith.constant 0 : i32
    %93 = tpu.memref_slice %arg9[%c3_i32_48, %c0_i32_51] : memref<8x128xf32, #tpu.memory_space<vmem>> -> memref<1x128xf32, #tpu.memory_space<vmem>>
    %94 = tpu.memref_squeeze %93 : memref<1x128xf32, #tpu.memory_space<vmem>> -> memref<128xf32, #tpu.memory_space<vmem>>
    %95 = tpu.memref_slice %arg10[%c3_i32_49] : memref<8x!tpu.dma_semaphore, #tpu.memory_space<semaphore_mem>> -> memref<1x!tpu.dma_semaphore, #tpu.memory_space<semaphore_mem>>
    %96 = tpu.memref_squeeze %95 : memref<1x!tpu.dma_semaphore, #tpu.memory_space<semaphore_mem>> -> memref<!tpu.dma_semaphore, #tpu.memory_space<semaphore_mem>>
    tpu.wait_dma2 semaphore(%96 : memref<!tpu.dma_semaphore, #tpu.memory_space<semaphore_mem>>) src(%92 : memref<128xf32, #tpu.memory_space<any>>) dst(%94 : memref<128xf32, #tpu.memory_space<vmem>>)
    %c0_i32_52 = arith.constant 0 : i32
    %c4_i32_53 = arith.constant 4 : i32
    %c4_i32_54 = arith.constant 4 : i32
    %c0_i32_55 = arith.constant 0 : i32
    %97 = tpu.memref_slice %arg2[%c0_i32_52, %c0_i32_55] : memref<600x128xf32, #tpu.memory_space<any>> -> memref<1x128xf32, #tpu.memory_space<any>>
    %98 = tpu.memref_squeeze %97 : memref<1x128xf32, #tpu.memory_space<any>> -> memref<128xf32, #tpu.memory_space<any>>
    %c0_i32_56 = arith.constant 0 : i32
    %99 = tpu.memref_slice %arg9[%c4_i32_53, %c0_i32_56] : memref<8x128xf32, #tpu.memory_space<vmem>> -> memref<1x128xf32, #tpu.memory_space<vmem>>
    %100 = tpu.memref_squeeze %99 : memref<1x128xf32, #tpu.memory_space<vmem>> -> memref<128xf32, #tpu.memory_space<vmem>>
    %101 = tpu.memref_slice %arg10[%c4_i32_54] : memref<8x!tpu.dma_semaphore, #tpu.memory_space<semaphore_mem>> -> memref<1x!tpu.dma_semaphore, #tpu.memory_space<semaphore_mem>>
    %102 = tpu.memref_squeeze %101 : memref<1x!tpu.dma_semaphore, #tpu.memory_space<semaphore_mem>> -> memref<!tpu.dma_semaphore, #tpu.memory_space<semaphore_mem>>
    tpu.wait_dma2 semaphore(%102 : memref<!tpu.dma_semaphore, #tpu.memory_space<semaphore_mem>>) src(%98 : memref<128xf32, #tpu.memory_space<any>>) dst(%100 : memref<128xf32, #tpu.memory_space<vmem>>)
    %c0_i32_57 = arith.constant 0 : i32
    %c5_i32_58 = arith.constant 5 : i32
    %c5_i32_59 = arith.constant 5 : i32
    %c0_i32_60 = arith.constant 0 : i32
    %103 = tpu.memref_slice %arg2[%c0_i32_57, %c0_i32_60] : memref<600x128xf32, #tpu.memory_space<any>> -> memref<1x128xf32, #tpu.memory_space<any>>
    %104 = tpu.memref_squeeze %103 : memref<1x128xf32, #tpu.memory_space<any>> -> memref<128xf32, #tpu.memory_space<any>>
    %c0_i32_61 = arith.constant 0 : i32
    %105 = tpu.memref_slice %arg9[%c5_i32_58, %c0_i32_61] : memref<8x128xf32, #tpu.memory_space<vmem>> -> memref<1x128xf32, #tpu.memory_space<vmem>>
    %106 = tpu.memref_squeeze %105 : memref<1x128xf32, #tpu.memory_space<vmem>> -> memref<128xf32, #tpu.memory_space<vmem>>
    %107 = tpu.memref_slice %arg10[%c5_i32_59] : memref<8x!tpu.dma_semaphore, #tpu.memory_space<semaphore_mem>> -> memref<1x!tpu.dma_semaphore, #tpu.memory_space<semaphore_mem>>
    %108 = tpu.memref_squeeze %107 : memref<1x!tpu.dma_semaphore, #tpu.memory_space<semaphore_mem>> -> memref<!tpu.dma_semaphore, #tpu.memory_space<semaphore_mem>>
    tpu.wait_dma2 semaphore(%108 : memref<!tpu.dma_semaphore, #tpu.memory_space<semaphore_mem>>) src(%104 : memref<128xf32, #tpu.memory_space<any>>) dst(%106 : memref<128xf32, #tpu.memory_space<vmem>>)
    %c0_i32_62 = arith.constant 0 : i32
    %c6_i32_63 = arith.constant 6 : i32
    %c6_i32_64 = arith.constant 6 : i32
    %c0_i32_65 = arith.constant 0 : i32
    %109 = tpu.memref_slice %arg2[%c0_i32_62, %c0_i32_65] : memref<600x128xf32, #tpu.memory_space<any>> -> memref<1x128xf32, #tpu.memory_space<any>>
    %110 = tpu.memref_squeeze %109 : memref<1x128xf32, #tpu.memory_space<any>> -> memref<128xf32, #tpu.memory_space<any>>
    %c0_i32_66 = arith.constant 0 : i32
    %111 = tpu.memref_slice %arg9[%c6_i32_63, %c0_i32_66] : memref<8x128xf32, #tpu.memory_space<vmem>> -> memref<1x128xf32, #tpu.memory_space<vmem>>
    %112 = tpu.memref_squeeze %111 : memref<1x128xf32, #tpu.memory_space<vmem>> -> memref<128xf32, #tpu.memory_space<vmem>>
    %113 = tpu.memref_slice %arg10[%c6_i32_64] : memref<8x!tpu.dma_semaphore, #tpu.memory_space<semaphore_mem>> -> memref<1x!tpu.dma_semaphore, #tpu.memory_space<semaphore_mem>>
    %114 = tpu.memref_squeeze %113 : memref<1x!tpu.dma_semaphore, #tpu.memory_space<semaphore_mem>> -> memref<!tpu.dma_semaphore, #tpu.memory_space<semaphore_mem>>
    tpu.wait_dma2 semaphore(%114 : memref<!tpu.dma_semaphore, #tpu.memory_space<semaphore_mem>>) src(%110 : memref<128xf32, #tpu.memory_space<any>>) dst(%112 : memref<128xf32, #tpu.memory_space<vmem>>)
    %c0_i32_67 = arith.constant 0 : i32
    %c7_i32_68 = arith.constant 7 : i32
    %c7_i32_69 = arith.constant 7 : i32
    %c0_i32_70 = arith.constant 0 : i32
    %115 = tpu.memref_slice %arg2[%c0_i32_67, %c0_i32_70] : memref<600x128xf32, #tpu.memory_space<any>> -> memref<1x128xf32, #tpu.memory_space<any>>
    %116 = tpu.memref_squeeze %115 : memref<1x128xf32, #tpu.memory_space<any>> -> memref<128xf32, #tpu.memory_space<any>>
    %c0_i32_71 = arith.constant 0 : i32
    %117 = tpu.memref_slice %arg9[%c7_i32_68, %c0_i32_71] : memref<8x128xf32, #tpu.memory_space<vmem>> -> memref<1x128xf32, #tpu.memory_space<vmem>>
    %118 = tpu.memref_squeeze %117 : memref<1x128xf32, #tpu.memory_space<vmem>> -> memref<128xf32, #tpu.memory_space<vmem>>
    %119 = tpu.memref_slice %arg10[%c7_i32_69] : memref<8x!tpu.dma_semaphore, #tpu.memory_space<semaphore_mem>> -> memref<1x!tpu.dma_semaphore, #tpu.memory_space<semaphore_mem>>
    %120 = tpu.memref_squeeze %119 : memref<1x!tpu.dma_semaphore, #tpu.memory_space<semaphore_mem>> -> memref<!tpu.dma_semaphore, #tpu.memory_space<semaphore_mem>>
    tpu.wait_dma2 semaphore(%120 : memref<!tpu.dma_semaphore, #tpu.memory_space<semaphore_mem>>) src(%116 : memref<128xf32, #tpu.memory_space<any>>) dst(%118 : memref<128xf32, #tpu.memory_space<vmem>>)
    %c0 = arith.constant 0 : index
    %c0_72 = arith.constant 0 : index
    %121 = vector.load %arg9[%c0, %c0_72] : memref<8x128xf32, #tpu.memory_space<vmem>>, vector<8x128xf32>
    %c0_73 = arith.constant 0 : index
    %c0_74 = arith.constant 0 : index
    %122 = vector.load %arg3[%c0_73, %c0_74] : memref<128x128xf32, #tpu.memory_space<vmem>>, vector<128x128xf32>
    %cst = arith.constant dense<0.000000e+00> : vector<8x128xf32>
    %123 = tpu.matmul %121, %122, %cst {dimension_numbers = #tpu.dot_dimension_numbers<[1], [0], [0], [1], [0, 0, 1, 1], [], []>} : vector<8x128xf32>, vector<128x128xf32>, vector<8x128xf32> -> vector<8x128xf32>
    %c0_75 = arith.constant 0 : index
    %c0_76 = arith.constant 0 : index
    %124 = vector.load %arg4[%c0_75, %c0_76] : memref<1x128xf32, #tpu.memory_space<vmem>>, vector<1x128xf32>
    %125 = vector.broadcast %124 : vector<1x128xf32> to vector<8x128xf32>
    %126 = arith.addf %123, %125 : vector<8x128xf32>
    %cst_77 = arith.constant 0.000000e+00 : f32
    %127 = vector.broadcast %cst_77 : f32 to vector<8x128xf32>
    %128 = arith.maximumf %126, %127 : vector<8x128xf32>
    %c0_78 = arith.constant 0 : index
    %c0_79 = arith.constant 0 : index
    %129 = vector.load %arg8[%c0_78, %c0_79] : memref<8x128xf32, #tpu.memory_space<vmem>>, vector<8x128xf32>
    tpu.vector_store %arg8[%c0_78, %c0_79], %128 {strides = array<i32>} : memref<8x128xf32, #tpu.memory_space<vmem>>, vector<8x128xf32>,
    %c0_80 = arith.constant 0 : index
    %c0_81 = arith.constant 0 : index
    %130 = vector.load %arg5[%c0_80, %c0_81] : memref<128x640xf32, #tpu.memory_space<vmem>>, vector<128x640xf32>
    %cst_82 = arith.constant dense<0.000000e+00> : vector<8x640xf32>
    %131 = tpu.matmul %128, %130, %cst_82 {dimension_numbers = #tpu.dot_dimension_numbers<[1], [0], [0], [1], [0, 0, 1, 1], [], []>} : vector<8x128xf32>, vector<128x640xf32>, vector<8x640xf32> -> vector<8x640xf32>
    %c0_83 = arith.constant 0 : index
    %c0_84 = arith.constant 0 : index
    %132 = vector.load %arg6[%c0_83, %c0_84] : memref<1x640xf32, #tpu.memory_space<vmem>>, vector<1x640xf32>
    %133 = vector.broadcast %132 : vector<1x640xf32> to vector<8x640xf32>
    %134 = arith.addf %131, %133 : vector<8x640xf32>
    %cst_85 = arith.constant dense<0xFF800000> : vector<8xf32>
    %135 = vector.multi_reduction <maximumf>, %134, %cst_85 [1] : vector<8x640xf32> to vector<8xf32>
    %136 = vector.shape_cast %135 : vector<8xf32> to vector<8x1xf32>
    %137 = vector.broadcast %136 : vector<8x1xf32> to vector<8x640xf32>
    %138 = arith.subf %134, %137 : vector<8x640xf32>
    %139 = math.exp %138 : vector<8x640xf32>
    %cst_86 = arith.constant dense<0.000000e+00> : vector<8xf32>
    %140 = vector.multi_reduction <add>, %139, %cst_86 [1] : vector<8x640xf32> to vector<8xf32>
    %141 = vector.shape_cast %140 : vector<8xf32> to vector<8x1xf32>
    %142 = tpu.reciprocal %141 {approx = true} : vector<8x1xf32> -> vector<8x1xf32>
    %143 = vector.broadcast %142 : vector<8x1xf32> to vector<8x640xf32>
    %144 = arith.mulf %139, %143 : vector<8x640xf32>
    %c0_87 = arith.constant 0 : index
    %c0_88 = arith.constant 0 : index
    %145 = vector.load %arg7[%c0_87, %c0_88] : memref<8x640xf32, #tpu.memory_space<vmem>>, vector<8x640xf32>
    tpu.vector_store %arg7[%c0_87, %c0_88], %144 {strides = array<i32>} : memref<8x640xf32, #tpu.memory_space<vmem>>, vector<8x640xf32>,
    return
  }
  func.func @transform_1(%arg0: i32, %arg1: memref<16xi32, #tpu.memory_space<smem>>) -> (i32, i32) {
    %c0_i32 = arith.constant 0 : i32
    %c0_i32_0 = arith.constant 0 : i32
    %c0_i32_1 = arith.constant 0 : i32
    return %c0_i32, %c0_i32_0 : i32, i32
  }
  func.func @transform_2(%arg0: i32, %arg1: memref<16xi32, #tpu.memory_space<smem>>) -> (i32, i32) {
    %c0_i32 = arith.constant 0 : i32
    %c0_i32_0 = arith.constant 0 : i32
    %c0_i32_1 = arith.constant 0 : i32
    return %c0_i32, %c0_i32_0 : i32, i32
  }
  func.func @transform_3(%arg0: i32, %arg1: memref<16xi32, #tpu.memory_space<smem>>) -> (i32, i32) {
    %c0_i32 = arith.constant 0 : i32
    %c0_i32_0 = arith.constant 0 : i32
    %c0_i32_1 = arith.constant 0 : i32
    return %c0_i32, %c0_i32_0 : i32, i32
  }
  func.func @transform_4(%arg0: i32, %arg1: memref<16xi32, #tpu.memory_space<smem>>) -> (i32, i32) {
    %c0_i32 = arith.constant 0 : i32
    %c0_i32_0 = arith.constant 0 : i32
    %c0_i32_1 = arith.constant 0 : i32
    return %c0_i32, %c0_i32_0 : i32, i32
  }
  func.func @transform_5(%arg0: i32, %arg1: memref<16xi32, #tpu.memory_space<smem>>) -> (i32, i32) {
    %c0_i32 = arith.constant 0 : i32
    %c0_i32_0 = arith.constant 0 : i32
    return %arg0, %c0_i32 : i32, i32
  }
  func.func @transform_6(%arg0: i32, %arg1: memref<16xi32, #tpu.memory_space<smem>>) -> (i32, i32) {
    %c0_i32 = arith.constant 0 : i32
    %c0_i32_0 = arith.constant 0 : i32
    return %arg0, %c0_i32 : i32, i32
  }
}

</mosaic_0001>

<llo_original>
// kernel: tpu_custom_call.1
$region0: #{tpu_custom_call.1}
  #allocation0 [shape = 'u32[]', space=smem, size = 0x4, offset = 0x4, fixed_abs, tag = 'smem constant byte address 0x4 - core index']
  #allocation1 [shape = 'u32[144,128]{1,0:T(1,128)}', space=vmem, size = 0x12000, scoped, tag = 'internal scratch']
  #allocation2 [shape = 'f32[8,128]{1,0:T(8,128)}', space=vmem, size = 0x1000, scoped, tag = 'scratch operand']
  #allocation3 [shape = 's32[8]{0}', space=sflag, size = 0x20, scoped, tag = 'scratch operand']
  #allocation4 [shape = 's32[1]{0}', space=sflag, size = 0x4, scoped, tag = 'scoped memory for tpu_custom_call.1']
  #allocation5 [shape = 'u8[512]{0}', space=smem, size = 0x200, scoped, tag = 'prefetched SMEM operand 0']
  #allocation14 [shape = 's32[]', space=sflag, size = 0x4, offset = 0, fixed_abs, tag = 'sflag constant byte address 0x0 - dummy sync flag']
  #allocation15 [shape = 's32[]', space=sflag, size = 0x4, offset = 0, fixed_abs, tag = 'sflag constant byte address 0x0 - dummy sync flag']
  #allocation16 [shape = 'u32[]', space=smem, size = 0x4, offset = 0x44, fixed_abs, tag = 'smem constant byte address 0x44 - assertion arg 0']
  #allocation17 [shape = 'u32[]', space=smem, size = 0x4, offset = 0x48, fixed_abs, tag = 'smem constant byte address 0x48 - assertion arg 1']
  #allocation18 [shape = 's32[]', space=sflag, size = 0x4, offset = 0, fixed_abs, tag = 'sflag constant byte address 0x0 - dummy sync flag']
  #allocation19 [shape = 's32[]', space=sflag, size = 0x4, offset = 0, fixed_abs, tag = 'sflag constant byte address 0x0 - dummy sync flag']
  #allocation20 [shape = 's32[]', space=sflag, size = 0x4, offset = 0, fixed_abs, tag = 'sflag constant byte address 0x0 - dummy sync flag']
  #allocation21 [shape = 's32[]', space=sflag, size = 0x4, offset = 0, fixed_abs, tag = 'sflag constant byte address 0x0 - dummy sync flag']
  #allocation22 [shape = 's32[]', space=sflag, size = 0x4, offset = 0, fixed_abs, tag = 'sflag constant byte address 0x0 - dummy sync flag']
  #allocation23 [shape = 's32[]', space=sflag, size = 0x4, offset = 0, fixed_abs, tag = 'sflag constant byte address 0x0 - dummy sync flag']
  #allocation24 [shape = 's32[]', space=sflag, size = 0x4, offset = 0, fixed_abs, tag = 'sflag constant byte address 0x0 - dummy sync flag']
  #allocation25 [shape = 's32[]', space=sflag, size = 0x4, offset = 0, fixed_abs, tag = 'sflag constant byte address 0x0 - dummy sync flag']
  #allocation26 [shape = 's32[]', space=sflag, size = 0x4, offset = 0, fixed_abs, tag = 'sflag constant byte address 0x0 - dummy sync flag']
  #allocation27 [shape = 's32[]', space=sflag, size = 0x4, offset = 0, fixed_abs, tag = 'sflag constant byte address 0x0 - dummy sync flag']
  #allocation28 [shape = 's32[]', space=sflag, size = 0x4, offset = 0, fixed_abs, tag = 'sflag constant byte address 0x0 - dummy sync flag']
  #allocation29 [shape = 's32[]', space=sflag, size = 0x4, offset = 0, fixed_abs, tag = 'sflag constant byte address 0x0 - dummy sync flag']
  #allocation30 [shape = 's32[]', space=sflag, size = 0x4, offset = 0, fixed_abs, tag = 'sflag constant byte address 0x0 - dummy sync flag']
  #allocation31 [shape = 's32[]', space=sflag, size = 0x4, offset = 0, fixed_abs, tag = 'sflag constant byte address 0x0 - dummy sync flag']
  %s0 = inlined_call_operand.hbm [shape: s32[16], index: 0, kind: input, shape index: {}]
  %s1 = inlined_call_operand.hbm [shape: f32[600,128], index: 1, kind: input, shape index: {}]
  %s2 = inlined_call_operand.hbm [shape: f32[128,128], index: 2, kind: input, shape index: {}]
  %s3 = inlined_call_operand.vmem [shape: f32[1,128], index: 3, kind: input, shape index: {}]
  %s4 = inlined_call_operand.hbm [shape: f32[128,640], index: 4, kind: input, shape index: {}]
  %s5 = inlined_call_operand.vmem [shape: f32[1,640], index: 5, kind: input, shape index: {}]
  %s6 = inlined_call_operand.hbm [shape: f32[16,640], index: 6, kind: output, shape index: {0}]
  %s7 = inlined_call_operand.hbm [shape: f32[16,128], index: 7, kind: output, shape index: {1}]
  %8 = xla_tuple %s6, %s7
  %s9 = sld [smem:[#allocation0]]
  $region97: #{tpu_custom_call.1} parent=0
    _
  %s11 = ssub.s32 1, %s9
  %s12 = scalar_select 0, %s11, %s9
  %14 = dma.hbm_to_smem %s0, 16, [#allocation5], [#allocation4]
  %15 = dma.done [#allocation4], 16
  %16 = sfence
  $region1: #{tpu_custom_call.1} parent=0
    #allocation6 [shape = 'u8[65536]{0}', space=vmem, size = 0x10000, scoped, tag = 'input window, operand 2, single buffered']
    #allocation7 [shape = 's32[2]{0}', space=sflag, size = 0x8, scoped, tag = 'scoped memory for tpu_custom_call.1']
    #allocation8 [shape = 's32[2]{0}', space=sflag, size = 0x8, scoped, tag = 'scoped memory for tpu_custom_call.1']
    #allocation9 [shape = 'u8[327680]{0}', space=vmem, size = 0x50000, scoped, tag = 'input window, operand 4, single buffered']
    #allocation10 [shape = 's32[1]{0}', space=sflag, size = 0x4, scoped, tag = 'scoped memory for tpu_custom_call.1']
    #allocation11 [shape = 'u8[40960]{0}', space=vmem, size = 0xa000, scoped, tag = 'output window, operand 0']
    #allocation12 [shape = 'u8[8192]{0}', space=vmem, size = 0x2000, scoped, tag = 'output window, operand 1']
    #allocation13 [shape = 's32[2]{0}', space=sflag, size = 0x8, scoped, tag = 'scoped memory for tpu_custom_call.1']
    %17 = vsyncpa [#allocation7], 0
    %18 = vsyncpa [#allocation10], 0
    %19 = vsyncpa [#allocation8], 0
    %s20 = scalar_lea.sflag [#allocation8], 1
    %21 = vsyncpa %s20, 0
    %22 = vsyncpa [#allocation13], 0
    %s23 = scalar_lea.sflag [#allocation13], 1
    %24 = vsyncpa %s23, 0
    loop: start=0, step=1, limit=4
    $region2: #{tpu_custom_call.1} parent=1 // loop_pre_header
      _
    $region3: #{tpu_custom_call.1} parent=1 // loop_header
      %s26 = sphi 0, %s30
      %p27 = scmp.ge.s32.totalorder %s26, 4
      %s34 = sphi 0, %s34
      %s36 = sphi 0, %s34
      %s37 = sphi 0, %s36
      %s51 = sphi 0, %s37
      %s55 = sphi 0, %s55
      %s57 = sphi 0, %s55
      %s58 = sphi 0, %s57
      %s72 = sphi 0, %s58
      %s76 = sphi 0, %s76
      %s78 = sphi 0, %s76
      %s79 = sphi 0, %s78
      %s93 = sphi 0, %s79
      %s97 = sphi 0, %s97
      %s99 = sphi 0, %s97
      %s100 = sphi 0, %s99
      %s114 = sphi 0, %s100
      %s120 = sphi 0, %s122
      %s123 = sphi 0, %s120
      %s124 = sphi 0, %s123
      %s140 = sphi 0, %s124
      %s146 = sphi 0, %s148
      %s149 = sphi 0, %s146
      %s150 = sphi 0, %s149
      %s166 = sphi 0, %s150
    $region4: #{tpu_custom_call.1} parent=1 // loop_header_branch
      %29 = sbr.rel (%p27) target = $region8
    $region5: #{tpu_custom_call.1} parent=1 // loop_body
      %s31 = ssub.s32 %s26, 1
      %s32 = ssub.s32 %s26, 2
      %s33 = sadd.s32 %s26, 1
      %s35 = sadd.s32 %s34, 1
      %p38 = scmp.eq.s32.totalorder %s26, 1
      %p39 = scmp.ne.s32.totalorder %s34, %s36
      %p40 = scmp.eq.s32.totalorder %s26, 0
      %p41 = por %p39, %p40
      %p42 = scmp.ne.s32.totalorder %s34, %s36
      %p43 = scmp.eq.s32.totalorder %s31, 1
      %p44 = por %p42, %p43
      %p45 = scmp.ne.s32.totalorder %s36, %s37
      %p46 = scmp.eq.s32.totalorder %s31, 0
      %p47 = por %p45, %p46
      %p48 = scmp.ne.s32.totalorder %s36, %s37
      %p49 = scmp.eq.s32.totalorder %s32, 1
      %p50 = por %p48, %p49
      %p52 = scmp.ne.s32.totalorder %s37, %s51
      %p53 = scmp.eq.s32.totalorder %s32, 0
      %p54 = por %p52, %p53
      %s56 = sadd.s32 %s55, 1
      %p59 = scmp.eq.s32.totalorder %s26, 1
      %p60 = scmp.ne.s32.totalorder %s55, %s57
      %p61 = scmp.eq.s32.totalorder %s26, 0
      %p62 = por %p60, %p61
      %p63 = scmp.ne.s32.totalorder %s55, %s57
      %p64 = scmp.eq.s32.totalorder %s31, 1
      %p65 = por %p63, %p64
      %p66 = scmp.ne.s32.totalorder %s57, %s58
      %p67 = scmp.eq.s32.totalorder %s31, 0
      %p68 = por %p66, %p67
      %p69 = scmp.ne.s32.totalorder %s57, %s58
      %p70 = scmp.eq.s32.totalorder %s32, 1
      %p71 = por %p69, %p70
      %p73 = scmp.ne.s32.totalorder %s58, %s72
      %p74 = scmp.eq.s32.totalorder %s32, 0
      %p75 = por %p73, %p74
      %s77 = sadd.s32 %s76, 1
      %p80 = scmp.eq.s32.totalorder %s26, 1
      %p81 = scmp.ne.s32.totalorder %s76, %s78
      %p82 = scmp.eq.s32.totalorder %s26, 0
      %p83 = por %p81, %p82
      %p84 = scmp.ne.s32.totalorder %s76, %s78
      %p85 = scmp.eq.s32.totalorder %s31, 1
      %p86 = por %p84, %p85
      %p87 = scmp.ne.s32.totalorder %s78, %s79
      %p88 = scmp.eq.s32.totalorder %s31, 0
      %p89 = por %p87, %p88
      %p90 = scmp.ne.s32.totalorder %s78, %s79
      %p91 = scmp.eq.s32.totalorder %s32, 1
      %p92 = por %p90, %p91
      %p94 = scmp.ne.s32.totalorder %s79, %s93
      %p95 = scmp.eq.s32.totalorder %s32, 0
      %p96 = por %p94, %p95
      %s98 = sadd.s32 %s97, 1
      %p101 = scmp.eq.s32.totalorder %s26, 1
      %p102 = scmp.ne.s32.totalorder %s97, %s99
      %p103 = scmp.eq.s32.totalorder %s26, 0
      %p104 = por %p102, %p103
      %p105 = scmp.ne.s32.totalorder %s97, %s99
      %p106 = scmp.eq.s32.totalorder %s31, 1
      %p107 = por %p105, %p106
      %p108 = scmp.ne.s32.totalorder %s99, %s100
      %p109 = scmp.eq.s32.totalorder %s31, 0
      %p110 = por %p108, %p109
      %p111 = scmp.ne.s32.totalorder %s99, %s100
      %p112 = scmp.eq.s32.totalorder %s32, 1
      %p113 = por %p111, %p112
      %p115 = scmp.ne.s32.totalorder %s100, %s114
      %p116 = scmp.eq.s32.totalorder %s32, 0
      %p117 = por %p115, %p116
      %s118 = ssub.s32 %s26, %s33
      %p119 = scmp.eq.s32.totalorder %s118, 0
      %s121 = sadd.s32 %s120, 1
      %s122 = scalar_select %p119, %s120, %s121
      %p125 = pneg %p119
      %p126 = scmp.eq.s32.totalorder %s26, 1
      %p127 = por %p125, %p126
      %p128 = scmp.ne.s32.totalorder %s120, %s123
      %p129 = scmp.eq.s32.totalorder %s26, 0
      %p130 = por %p128, %p129
      %p131 = scmp.ne.s32.totalorder %s120, %s123
      %p132 = scmp.eq.s32.totalorder %s31, 1
      %p133 = por %p131, %p132
      %p134 = scmp.ne.s32.totalorder %s123, %s124
      %p135 = scmp.eq.s32.totalorder %s31, 0
      %p136 = por %p134, %p135
      %p137 = scmp.ne.s32.totalorder %s123, %s124
      %p138 = scmp.eq.s32.totalorder %s32, 1
      %p139 = por %p137, %p138
      %p141 = scmp.ne.s32.totalorder %s124, %s140
      %p142 = scmp.eq.s32.totalorder %s32, 0
      %p143 = por %p141, %p142
      %s144 = ssub.s32 %s26, %s33
      %p145 = scmp.eq.s32.totalorder %s144, 0
      %s147 = sadd.s32 %s146, 1
      %s148 = scalar_select %p145, %s146, %s147
      %p151 = pneg %p145
      %p152 = scmp.eq.s32.totalorder %s26, 1
      %p153 = por %p151, %p152
      %p154 = scmp.ne.s32.totalorder %s146, %s149
      %p155 = scmp.eq.s32.totalorder %s26, 0
      %p156 = por %p154, %p155
      %p157 = scmp.ne.s32.totalorder %s146, %s149
      %p158 = scmp.eq.s32.totalorder %s31, 1
      %p159 = por %p157, %p158
      %p160 = scmp.ne.s32.totalorder %s149, %s150
      %p161 = scmp.eq.s32.totalorder %s31, 0
      %p162 = por %p160, %p161
      %p163 = scmp.ne.s32.totalorder %s149, %s150
      %p164 = scmp.eq.s32.totalorder %s32, 1
      %p165 = por %p163, %p164
      %p167 = scmp.ne.s32.totalorder %s150, %s166
      %p168 = scmp.eq.s32.totalorder %s32, 0
      %p169 = por %p167, %p168
      %p170 = scmp.le.s32.totalorder 1, %s26
      %p171 = scmp.lt.s32.totalorder %s26, 3
      %p172 = pnand %p170, %p171
      %p173 = pneg %p172
      // Predicated region
      $region9: #{tpu_custom_call.1} parent=5 // pred_check
        _
      $region10: #{tpu_custom_call.1} parent=5 // pred_check_branch
        %175 = sbr.rel (%p172) target = $region12
      $region11: #{tpu_custom_call.1} parent=5 // pred_region
        %s176 = ssub.s32 %s26, 1
        // Predicated region
        $region13: #{tpu_custom_call.1} parent=11 // pred_check
          %p177 = pneg %p47
        $region14: #{tpu_custom_call.1} parent=11 // pred_check_branch
          %179 = sbr.rel (%p177) target = $region16
        $region15: #{tpu_custom_call.1} parent=11 // pred_region
          %s181 = ssub.s32 2048, 2048
          %182 = vsyncadd [#allocation7], %s181
          %s183 = sshll.u32 [#allocation6], 4
          %s184 = int_to_ptr.vmem [resolvable:$true] %s183
          %189 = dma.hbm_to_vmem [thread:$0]  %s2, 2048, %s184, [#allocation7], 128, 128, 8
        $region16: #{tpu_custom_call.1} parent=11 // pred_fallthru
          _
        // Predicated region
        $region17: #{tpu_custom_call.1} parent=11 // pred_check
          %p190 = pneg %p68
        $region18: #{tpu_custom_call.1} parent=11 // pred_check_branch
          %192 = sbr.rel (%p190) target = $region20
        $region19: #{tpu_custom_call.1} parent=11 // pred_region
          _
        $region20: #{tpu_custom_call.1} parent=11 // pred_fallthru
          _
        // Predicated region
        $region21: #{tpu_custom_call.1} parent=11 // pred_check
          %p193 = pneg %p89
        $region22: #{tpu_custom_call.1} parent=11 // pred_check_branch
          %195 = sbr.rel (%p193) target = $region24
        $region23: #{tpu_custom_call.1} parent=11 // pred_region
          %s197 = ssub.s32 10240, 10240
          %198 = vsyncadd [#allocation10], %s197
          %s199 = sshll.u32 [#allocation9], 4
          %s200 = int_to_ptr.vmem [resolvable:$true] %s199
          %205 = dma.hbm_to_vmem [thread:$0]  %s4, 10240, %s200, [#allocation10], 640, 640, 40
        $region24: #{tpu_custom_call.1} parent=11 // pred_fallthru
          _
        // Predicated region
        $region25: #{tpu_custom_call.1} parent=11 // pred_check
          %p206 = pneg %p110
        $region26: #{tpu_custom_call.1} parent=11 // pred_check_branch
          %208 = sbr.rel (%p206) target = $region28
        $region27: #{tpu_custom_call.1} parent=11 // pred_region
          _
        $region28: #{tpu_custom_call.1} parent=11 // pred_fallthru
          _
      $region12: #{tpu_custom_call.1} parent=5 // pred_fallthru
        _
      %p209 = scmp.lt.s32.totalorder %s26, 2
      // Predicated region
      $region29: #{tpu_custom_call.1} parent=5 // pred_check
        %p210 = pneg %p209
      $region30: #{tpu_custom_call.1} parent=5 // pred_check_branch
        %212 = sbr.rel (%p210) target = $region32
      $region31: #{tpu_custom_call.1} parent=5 // pred_region
        _
      $region32: #{tpu_custom_call.1} parent=5 // pred_fallthru
        _
      %p213 = scmp.le.s32.totalorder 1, %s26
      %p214 = scmp.lt.s32.totalorder %s26, 3
      %p215 = pnand %p213, %p214
      %p216 = pneg %p215
      // Predicated region
      $region33: #{tpu_custom_call.1} parent=5 // pred_check
        _
      $region34: #{tpu_custom_call.1} parent=5 // pred_check_branch
        %218 = sbr.rel (%p215) target = $region36
      $region35: #{tpu_custom_call.1} parent=5 // pred_region
        %s219 = ssub.s32 %s26, 1
        // Predicated region
        $region37: #{tpu_custom_call.1} parent=35 // pred_check
          %p220 = pneg %p47
        $region38: #{tpu_custom_call.1} parent=35 // pred_check_branch
          %222 = sbr.rel (%p220) target = $region40
        $region39: #{tpu_custom_call.1} parent=35 // pred_region
          %223 = dma.done [#allocation7], 2048
        $region40: #{tpu_custom_call.1} parent=35 // pred_fallthru
          _
        // Predicated region
        $region41: #{tpu_custom_call.1} parent=35 // pred_check
          %p224 = pneg %p89
        $region42: #{tpu_custom_call.1} parent=35 // pred_check_branch
          %226 = sbr.rel (%p224) target = $region44
        $region43: #{tpu_custom_call.1} parent=35 // pred_region
          %227 = dma.done [#allocation10], 10240
        $region44: #{tpu_custom_call.1} parent=35 // pred_fallthru
          _
        %p228 = pneg %p47
        %p229 = pneg %p44
        %p230 = pneg %p68
        %p231 = pneg %p65
        %p232 = pneg %p89
        %p233 = pneg %p86
        %p234 = pneg %p110
        %p235 = pneg %p107
        %p236 = pneg %p136
        %p237 = pneg %p133
        %s238 = sand.u32 %s123, 1
        %s239 = scalar_lea.sflag [#allocation8], %s238
        %s240 = sand.u32 %s123, 1
        %s241 = smul.addr %s240, 40
        %s242 = scalar_lea.vmem [#allocation11], %s241
        %p243 = pneg %p162
        %p244 = pneg %p159
        %s245 = sand.u32 %s149, 1
        %s246 = scalar_lea.sflag [#allocation13], %s245
        %s247 = sand.u32 %s149, 1
        %s248 = smul.addr %s247, 8
        %s249 = scalar_lea.vmem [#allocation12], %s248
        %s250 = smul.u32 %s31, 8
        %s251 = sld [smem:[#allocation5 + %s250]]
        %s252 = smul.addr %s251, 16
        %s253 = scalar_lea.hbm %s1, %s252
        // Predicated region
        $region45: #{tpu_custom_call.1} parent=35 // pred_check
          _
        $region46: #{tpu_custom_call.1} parent=35 // pred_check_branch
          %255 = sbr.rel target = $region48
        $region47: #{tpu_custom_call.1} parent=35 // pred_region
          %256 = sst [smem:[#allocation16]] [#allocation15]
          %257 = sst [smem:[#allocation17]] [#allocation14]
        $region48: #{tpu_custom_call.1} parent=35 // pred_fallthru
          _
        %259 = shalt.err (0)
        %s261 = sshll.u32 [#allocation2], 4
        %s262 = int_to_ptr.vmem [resolvable:$true] %s261
        %264 = dma.hbm_to_vmem [thread:$0]  %s253, 16, %s262, [#allocation3]
        %s265 = sadd.s32 %s250, 1
        %s266 = sld [smem:[#allocation5 + %s265]]
        %s267 = smul.addr %s266, 16
        %s268 = scalar_lea.hbm %s1, %s267
        %s269 = scalar_lea.vmem [#allocation2], 1
        %s270 = scalar_lea.sflag [#allocation3], 1
        // Predicated region
        $region49: #{tpu_custom_call.1} parent=35 // pred_check
          _
        $region50: #{tpu_custom_call.1} parent=35 // pred_check_branch
          %272 = sbr.rel target = $region52
        $region51: #{tpu_custom_call.1} parent=35 // pred_region
          %273 = sst [smem:[#allocation16]] [#allocation19]
          %274 = sst [smem:[#allocation17]] [#allocation18]
        $region52: #{tpu_custom_call.1} parent=35 // pred_fallthru
          _
        %276 = shalt.err (0)
        %s278 = sshll.u32 %s269, 4
        %s279 = int_to_ptr.vmem [resolvable:$true] %s278
        %281 = dma.hbm_to_vmem [thread:$0]  %s268, 16, %s279, %s270
        %s282 = sadd.s32 %s250, 2
        %s283 = sld [smem:[#allocation5 + %s282]]
        %s284 = smul.addr %s283, 16
        %s285 = scalar_lea.hbm %s1, %s284
        %s286 = scalar_lea.vmem [#allocation2], 2
        %s287 = scalar_lea.sflag [#allocation3], 2
        // Predicated region
        $region53: #{tpu_custom_call.1} parent=35 // pred_check
          _
        $region54: #{tpu_custom_call.1} parent=35 // pred_check_branch
          %289 = sbr.rel target = $region56
        $region55: #{tpu_custom_call.1} parent=35 // pred_region
          %290 = sst [smem:[#allocation16]] [#allocation21]
          %291 = sst [smem:[#allocation17]] [#allocation20]
        $region56: #{tpu_custom_call.1} parent=35 // pred_fallthru
          _
        %293 = shalt.err (0)
        %s295 = sshll.u32 %s286, 4
        %s296 = int_to_ptr.vmem [resolvable:$true] %s295
        %298 = dma.hbm_to_vmem [thread:$0]  %s285, 16, %s296, %s287
        %s299 = sadd.s32 %s250, 3
        %s300 = sld [smem:[#allocation5 + %s299]]
        %s301 = smul.addr %s300, 16
        %s302 = scalar_lea.hbm %s1, %s301
        %s303 = scalar_lea.vmem [#allocation2], 3
        %s304 = scalar_lea.sflag [#allocation3], 3
        // Predicated region
        $region57: #{tpu_custom_call.1} parent=35 // pred_check
          _
        $region58: #{tpu_custom_call.1} parent=35 // pred_check_branch
          %306 = sbr.rel target = $region60
        $region59: #{tpu_custom_call.1} parent=35 // pred_region
          %307 = sst [smem:[#allocation16]] [#allocation23]
          %308 = sst [smem:[#allocation17]] [#allocation22]
        $region60: #{tpu_custom_call.1} parent=35 // pred_fallthru
          _
        %310 = shalt.err (0)
        %s312 = sshll.u32 %s303, 4
        %s313 = int_to_ptr.vmem [resolvable:$true] %s312
        %315 = dma.hbm_to_vmem [thread:$0]  %s302, 16, %s313, %s304
        %s316 = sadd.s32 %s250, 4
        %s317 = sld [smem:[#allocation5 + %s316]]
        %s318 = smul.addr %s317, 16
        %s319 = scalar_lea.hbm %s1, %s318
        %s320 = scalar_lea.vmem [#allocation2], 4
        %s321 = scalar_lea.sflag [#allocation3], 4
        // Predicated region
        $region61: #{tpu_custom_call.1} parent=35 // pred_check
          _
        $region62: #{tpu_custom_call.1} parent=35 // pred_check_branch
          %323 = sbr.rel target = $region64
        $region63: #{tpu_custom_call.1} parent=35 // pred_region
          %324 = sst [smem:[#allocation16]] [#allocation25]
          %325 = sst [smem:[#allocation17]] [#allocation24]
        $region64: #{tpu_custom_call.1} parent=35 // pred_fallthru
          _
        %327 = shalt.err (0)
        %s329 = sshll.u32 %s320, 4
        %s330 = int_to_ptr.vmem [resolvable:$true] %s329
        %332 = dma.hbm_to_vmem [thread:$0]  %s319, 16, %s330, %s321
        %s333 = sadd.s32 %s250, 5
        %s334 = sld [smem:[#allocation5 + %s333]]
        %s335 = smul.addr %s334, 16
        %s336 = scalar_lea.hbm %s1, %s335
        %s337 = scalar_lea.vmem [#allocation2], 5
        %s338 = scalar_lea.sflag [#allocation3], 5
        // Predicated region
        $region65: #{tpu_custom_call.1} parent=35 // pred_check
          _
        $region66: #{tpu_custom_call.1} parent=35 // pred_check_branch
          %340 = sbr.rel target = $region68
        $region67: #{tpu_custom_call.1} parent=35 // pred_region
          %341 = sst [smem:[#allocation16]] [#allocation27]
          %342 = sst [smem:[#allocation17]] [#allocation26]
        $region68: #{tpu_custom_call.1} parent=35 // pred_fallthru
          _
        %344 = shalt.err (0)
        %s346 = sshll.u32 %s337, 4
        %s347 = int_to_ptr.vmem [resolvable:$true] %s346
        %349 = dma.hbm_to_vmem [thread:$0]  %s336, 16, %s347, %s338
        %s350 = sadd.s32 %s250, 6
        %s351 = sld [smem:[#allocation5 + %s350]]
        %s352 = smul.addr %s351, 16
        %s353 = scalar_lea.hbm %s1, %s352
        %s354 = scalar_lea.vmem [#allocation2], 6
        %s355 = scalar_lea.sflag [#allocation3], 6
        // Predicated region
        $region69: #{tpu_custom_call.1} parent=35 // pred_check
          _
        $region70: #{tpu_custom_call.1} parent=35 // pred_check_branch
          %357 = sbr.rel target = $region72
        $region71: #{tpu_custom_call.1} parent=35 // pred_region
          %358 = sst [smem:[#allocation16]] [#allocation29]
          %359 = sst [smem:[#allocation17]] [#allocation28]
        $region72: #{tpu_custom_call.1} parent=35 // pred_fallthru
          _
        %361 = shalt.err (0)
        %s363 = sshll.u32 %s354, 4
        %s364 = int_to_ptr.vmem [resolvable:$true] %s363
        %366 = dma.hbm_to_vmem [thread:$0]  %s353, 16, %s364, %s355
        %s367 = sadd.s32 %s250, 7
        %s368 = sld [smem:[#allocation5 + %s367]]
        %s369 = smul.addr %s368, 16
        %s370 = scalar_lea.hbm %s1, %s369
        %s371 = scalar_lea.vmem [#allocation2], 7
        %s372 = scalar_lea.sflag [#allocation3], 7
        // Predicated region
        $region73: #{tpu_custom_call.1} parent=35 // pred_check
          _
        $region74: #{tpu_custom_call.1} parent=35 // pred_check_branch
          %374 = sbr.rel target = $region76
        $region75: #{tpu_custom_call.1} parent=35 // pred_region
          %375 = sst [smem:[#allocation16]] [#allocation31]
          %376 = sst [smem:[#allocation17]] [#allocation30]
        $region76: #{tpu_custom_call.1} parent=35 // pred_fallthru
          _
        %378 = shalt.err (0)
        %s380 = sshll.u32 %s371, 4
        %s381 = int_to_ptr.vmem [resolvable:$true] %s380
        %383 = dma.hbm_to_vmem [thread:$0]  %s370, 16, %s381, %s372
        %385 = dma.done [#allocation3], 16
        %387 = dma.done %s270, 16
        %389 = dma.done %s287, 16
        %391 = dma.done %s304, 16
        %393 = dma.done %s321, 16
        %395 = dma.done %s338, 16
        %397 = dma.done %s355, 16
        %399 = dma.done %s372, 16
        %v400 = vld [vmem:[#allocation2] sm:$0xff]
        %v401 = vld [vmem:[#allocation6] sm:$0xff]
        %v402 = vld [vmem:[#allocation6 + $0x8] sm:$0xff]
        %v403 = vld [vmem:[#allocation6 + $0x10] sm:$0xff]
        %v404 = vld [vmem:[#allocation6 + $0x18] sm:$0xff]
        %v405 = vld [vmem:[#allocation6 + $0x20] sm:$0xff]
        %v406 = vld [vmem:[#allocation6 + $0x28] sm:$0xff]
        %v407 = vld [vmem:[#allocation6 + $0x30] sm:$0xff]
        %v408 = vld [vmem:[#allocation6 + $0x38] sm:$0xff]
        %v409 = vld [vmem:[#allocation6 + $0x40] sm:$0xff]
        %v410 = vld [vmem:[#allocation6 + $0x48] sm:$0xff]
        %v411 = vld [vmem:[#allocation6 + $0x50] sm:$0xff]
        %v412 = vld [vmem:[#allocation6 + $0x58] sm:$0xff]
        %v413 = vld [vmem:[#allocation6 + $0x60] sm:$0xff]
        %v414 = vld [vmem:[#allocation6 + $0x68] sm:$0xff]
        %v415 = vld [vmem:[#allocation6 + $0x70] sm:$0xff]
        %v416 = vld [vmem:[#allocation6 + $0x78] sm:$0xff]
        %v417 = vld [vmem:[%s3] sm:$0x1]
        %v419 = vlaneseq
        %v420 = vshrl.u32 %v419, 7
        %v421 = vsub.s32 0, %v420
        %v422 = vrot.slane %v417, %v421
        %424 = vmatprep.subr.mxu0 0.0
        %425 = vmatpush1.msra.mxu0 %v401
        %426 = vmatprep.subr.mxu0 0.0
        %427 = vmatpush1.msra.mxu0 %v402
        %428 = vmatprep.subr.mxu0 0.0
        %429 = vmatpush1.msra.mxu0 %v403
        %430 = vmatprep.subr.mxu0 0.0
        %431 = vmatpush1.msra.mxu0 %v404
        %432 = vmatprep.subr.mxu0 0.0
        %433 = vmatpush1.msra.mxu0 %v405
        %434 = vmatprep.subr.mxu0 0.0
        %435 = vmatpush1.msra.mxu0 %v406
        %436 = vmatprep.subr.mxu0 0.0
        %437 = vmatpush1.msra.mxu0 %v407
        %438 = vmatprep.subr.mxu0 0.0
        %439 = vmatpush1.msra.mxu0 %v408
        %440 = vmatprep.subr.mxu0 0.0
        %441 = vmatpush1.msra.mxu0 %v409
        %442 = vmatprep.subr.mxu0 0.0
        %443 = vmatpush1.msra.mxu0 %v410
        %444 = vmatprep.subr.mxu0 0.0
        %445 = vmatpush1.msra.mxu0 %v411
        %446 = vmatprep.subr.mxu0 0.0
        %447 = vmatpush1.msra.mxu0 %v412
        %448 = vmatprep.subr.mxu0 0.0
        %449 = vmatpush1.msra.mxu0 %v413
        %450 = vmatprep.subr.mxu0 0.0
        %451 = vmatpush1.msra.mxu0 %v414
        %452 = vmatprep.subr.mxu0 0.0
        %453 = vmatpush1.msra.mxu0 %v415
        %454 = vmatprep.subr.mxu0 0.0
        %455 = vmatpush1.msra.mxu0 %v416
        %456 = vmatprep.subr.mxu0 0.0
        %457 = vmatpush1.msra.mxu0 0.0
        %458 = vmatprep.subr.mxu0 0.0
        %459 = vmatpush1.msra.mxu0 0.0
        %460 = vmatprep.subr.mxu0 0.0
        %461 = vmatpush1.msra.mxu0 0.0
        %462 = vmatprep.subr.mxu0 0.0
        %463 = vmatpush1.msra.mxu0 0.0
        %464 = vmatprep.subr.mxu0 0.0
        %465 = vmatpush1.msra.mxu0 0.0
        %466 = vmatprep.subr.mxu0 0.0
        %467 = vmatpush1.msra.mxu0 0.0
        %468 = vmatprep.subr.mxu0 0.0
        %469 = vmatpush1.msra.mxu0 0.0
        %470 = vmatprep.subr.mxu0 0.0
        %471 = vmatpush1.msra.mxu0 0.0
        %472 = vmatprep.subr.mxu0 0.0
        %473 = vmatpush1.msra.mxu0 0.0
        %474 = vmatprep.subr.mxu0 0.0
        %475 = vmatpush1.msra.mxu0 0.0
        %476 = vmatprep.subr.mxu0 0.0
        %477 = vmatpush1.msra.mxu0 0.0
        %478 = vmatprep.subr.mxu0 0.0
        %479 = vmatpush1.msra.mxu0 0.0
        %480 = vmatprep.subr.mxu0 0.0
        %481 = vmatpush1.msra.mxu0 0.0
        %482 = vmatprep.subr.mxu0 0.0
        %483 = vmatpush1.msra.mxu0 0.0
        %484 = vmatprep.subr.mxu0 0.0
        %485 = vmatpush1.msra.mxu0 0.0
        %486 = vmatprep.subr.mxu0 0.0
        %487 = vmatpush1.msra.mxu0 0.0
        %488 = vmatprep.mubr.f32.mxu0 0.0
        %489 = vmatmul.mubr.f32.gmra.mrb[0].mxu0 %v400
        %v490 = vpop.f32.mrb[0].mxu0
        %v491 = vadd.f32 %v422, %v490
        %v492 = vpop.f32.mrb[0].mxu0
        %493 = vdwg.mxu0
        %v494 = vmax.f32 %v491, 0.0
        %495 = vst [vmem:[%s249] sm:$0xff] %v494
        %v496 = vld [vmem:[#allocation9] sm:$0xff]
        %v497 = vld [vmem:[#allocation9 + $0x8] sm:$0xff]
        %v498 = vld [vmem:[#allocation9 + $0x10] sm:$0xff]
        %v499 = vld [vmem:[#allocation9 + $0x18] sm:$0xff]
        %v500 = vld [vmem:[#allocation9 + $0x20] sm:$0xff]
        %v501 = vld [vmem:[#allocation9 + $0x28] sm:$0xff]
        %v502 = vld [vmem:[#allocation9 + $0x30] sm:$0xff]
        %v503 = vld [vmem:[#allocation9 + $0x38] sm:$0xff]
        %v504 = vld [vmem:[#allocation9 + $0x40] sm:$0xff]
        %v505 = vld [vmem:[#allocation9 + $0x48] sm:$0xff]
        %v506 = vld [vmem:[#allocation9 + $0x50] sm:$0xff]
        %v507 = vld [vmem:[#allocation9 + $0x58] sm:$0xff]
        %v508 = vld [vmem:[#allocation9 + $0x60] sm:$0xff]
        %v509 = vld [vmem:[#allocation9 + $0x68] sm:$0xff]
        %v510 = vld [vmem:[#allocation9 + $0x70] sm:$0xff]
        %v511 = vld [vmem:[#allocation9 + $0x78] sm:$0xff]
        %v512 = vld [vmem:[#allocation9 + $0x80] sm:$0xff]
        %v513 = vld [vmem:[#allocation9 + $0x88] sm:$0xff]
        %v514 = vld [vmem:[#allocation9 + $0x90] sm:$0xff]
        %v515 = vld [vmem:[#allocation9 + $0x98] sm:$0xff]
        %v516 = vld [vmem:[#allocation9 + $0xa0] sm:$0xff]
        %v517 = vld [vmem:[#allocation9 + $0xa8] sm:$0xff]
        %v518 = vld [vmem:[#allocation9 + $0xb0] sm:$0xff]
        %v519 = vld [vmem:[#allocation9 + $0xb8] sm:$0xff]
        %v520 = vld [vmem:[#allocation9 + $0xc0] sm:$0xff]
        %v521 = vld [vmem:[#allocation9 + $0xc8] sm:$0xff]
        %v522 = vld [vmem:[#allocation9 + $0xd0] sm:$0xff]
        %v523 = vld [vmem:[#allocation9 + $0xd8] sm:$0xff]
        %v524 = vld [vmem:[#allocation9 + $0xe0] sm:$0xff]
        %v525 = vld [vmem:[#allocation9 + $0xe8] sm:$0xff]
        %v526 = vld [vmem:[#allocation9 + $0xf0] sm:$0xff]
        %v527 = vld [vmem:[#allocation9 + $0xf8] sm:$0xff]
        %v528 = vld [vmem:[#allocation9 + $0x100] sm:$0xff]
        %v529 = vld [vmem:[#allocation9 + $0x108] sm:$0xff]
        %v530 = vld [vmem:[#allocation9 + $0x110] sm:$0xff]
        %v531 = vld [vmem:[#allocation9 + $0x118] sm:$0xff]
        %v532 = vld [vmem:[#allocation9 + $0x120] sm:$0xff]
        %v533 = vld [vmem:[#allocation9 + $0x128] sm:$0xff]
        %v534 = vld [vmem:[#allocation9 + $0x130] sm:$0xff]
        %v535 = vld [vmem:[#allocation9 + $0x138] sm:$0xff]
        %v536 = vld [vmem:[#allocation9 + $0x140] sm:$0xff]
        %v537 = vld [vmem:[#allocation9 + $0x148] sm:$0xff]
        %v538 = vld [vmem:[#allocation9 + $0x150] sm:$0xff]
        %v539 = vld [vmem:[#allocation9 + $0x158] sm:$0xff]
        %v540 = vld [vmem:[#allocation9 + $0x160] sm:$0xff]
        %v541 = vld [vmem:[#allocation9 + $0x168] sm:$0xff]
        %v542 = vld [vmem:[#allocation9 + $0x170] sm:$0xff]
        %v543 = vld [vmem:[#allocation9 + $0x178] sm:$0xff]
        %v544 = vld [vmem:[#allocation9 + $0x180] sm:$0xff]
        %v545 = vld [vmem:[#allocation9 + $0x188] sm:$0xff]
        %v546 = vld [vmem:[#allocation9 + $0x190] sm:$0xff]
        %v547 = vld [vmem:[#allocation9 + $0x198] sm:$0xff]
        %v548 = vld [vmem:[#allocation9 + $0x1a0] sm:$0xff]
        %v549 = vld [vmem:[#allocation9 + $0x1a8] sm:$0xff]
        %v550 = vld [vmem:[#allocation9 + $0x1b0] sm:$0xff]
        %v551 = vld [vmem:[#allocation9 + $0x1b8] sm:$0xff]
        %v552 = vld [vmem:[#allocation9 + $0x1c0] sm:$0xff]
        %v553 = vld [vmem:[#allocation9 + $0x1c8] sm:$0xff]
        %v554 = vld [vmem:[#allocation9 + $0x1d0] sm:$0xff]
        %v555 = vld [vmem:[#allocation9 + $0x1d8] sm:$0xff]
        %v556 = vld [vmem:[#allocation9 + $0x1e0] sm:$0xff]
        %v557 = vld [vmem:[#allocation9 + $0x1e8] sm:$0xff]
        %v558 = vld [vmem:[#allocation9 + $0x1f0] sm:$0xff]
        %v559 = vld [vmem:[#allocation9 + $0x1f8] sm:$0xff]
        %v560 = vld [vmem:[#allocation9 + $0x200] sm:$0xff]
        %v561 = vld [vmem:[#allocation9 + $0x208] sm:$0xff]
        %v562 = vld [vmem:[#allocation9 + $0x210] sm:$0xff]
        %v563 = vld [vmem:[#allocation9 + $0x218] sm:$0xff]
        %v564 = vld [vmem:[#allocation9 + $0x220] sm:$0xff]
        %v565 = vld [vmem:[#allocation9 + $0x228] sm:$0xff]
        %v566 = vld [vmem:[#allocation9 + $0x230] sm:$0xff]
        %v567 = vld [vmem:[#allocation9 + $0x238] sm:$0xff]
        %v568 = vld [vmem:[#allocation9 + $0x240] sm:$0xff]
        %v569 = vld [vmem:[#allocation9 + $0x248] sm:$0xff]
        %v570 = vld [vmem:[#allocation9 + $0x250] sm:$0xff]
        %v571 = vld [vmem:[#allocation9 + $0x258] sm:$0xff]
        %v572 = vld [vmem:[#allocation9 + $0x260] sm:$0xff]
        %v573 = vld [vmem:[#allocation9 + $0x268] sm:$0xff]
        %v574 = vld [vmem:[#allocation9 + $0x270] sm:$0xff]
        %v575 = vld [vmem:[#allocation9 + $0x278] sm:$0xff]
        %v576 = vld [vmem:[%s5] sm:$0x1f]
        %v578 = vlaneseq
        %v579 = vshrl.u32 %v578, 7
        %v580 = vsub.s32 0, %v579
        %v581 = vrot.slane %v576, %v580
        %v582 = vlaneseq
        %v583 = vshrl.u32 %v582, 7
        %v584 = vsub.s32 1, %v583
        %v585 = vrot.slane %v576, %v584
        %v586 = vlaneseq
        %v587 = vshrl.u32 %v586, 7
        %v588 = vsub.s32 2, %v587
        %v589 = vrot.slane %v576, %v588
        %v590 = vlaneseq
        %v591 = vshrl.u32 %v590, 7
        %v592 = vsub.s32 3, %v591
        %v593 = vrot.slane %v576, %v592
        %v594 = vlaneseq
        %v595 = vshrl.u32 %v594, 7
        %v596 = vsub.s32 4, %v595
        %v597 = vrot.slane %v576, %v596
        %603 = vmatprep.subr.mxu0 %v497
        %604 = vmatpush1.msra.mxu0 %v496
        %605 = vmatprep.subr.mxu0 %v502
        %606 = vmatpush1.msra.mxu0 %v501
        %607 = vmatprep.subr.mxu0 %v507
        %608 = vmatpush1.msra.mxu0 %v506
        %609 = vmatprep.subr.mxu0 %v512
        %610 = vmatpush1.msra.mxu0 %v511
        %611 = vmatprep.subr.mxu0 %v517
        %612 = vmatpush1.msra.mxu0 %v516
        %613 = vmatprep.subr.mxu0 %v522
        %614 = vmatpush1.msra.mxu0 %v521
        %615 = vmatprep.subr.mxu0 %v527
        %616 = vmatpush1.msra.mxu0 %v526
        %617 = vmatprep.subr.mxu0 %v532
        %618 = vmatpush1.msra.mxu0 %v531
        %619 = vmatprep.subr.mxu0 %v537
        %620 = vmatpush1.msra.mxu0 %v536
        %621 = vmatprep.subr.mxu0 %v542
        %622 = vmatpush1.msra.mxu0 %v541
        %623 = vmatprep.subr.mxu0 %v547
        %624 = vmatpush1.msra.mxu0 %v546
        %625 = vmatprep.subr.mxu0 %v552
        %626 = vmatpush1.msra.mxu0 %v551
        %627 = vmatprep.subr.mxu0 %v557
        %628 = vmatpush1.msra.mxu0 %v556
        %629 = vmatprep.subr.mxu0 %v562
        %630 = vmatpush1.msra.mxu0 %v561
        %631 = vmatprep.subr.mxu0 %v567
        %632 = vmatpush1.msra.mxu0 %v566
        %633 = vmatprep.subr.mxu0 %v572
        %634 = vmatpush1.msra.mxu0 %v571
        %635 = vmatprep.subr.mxu0 0.0
        %636 = vmatpush1.msra.mxu0 0.0
        %637 = vmatprep.subr.mxu0 0.0
        %638 = vmatpush1.msra.mxu0 0.0
        %639 = vmatprep.subr.mxu0 0.0
        %640 = vmatpush1.msra.mxu0 0.0
        %641 = vmatprep.subr.mxu0 0.0
        %642 = vmatpush1.msra.mxu0 0.0
        %643 = vmatprep.subr.mxu0 0.0
        %644 = vmatpush1.msra.mxu0 0.0
        %645 = vmatprep.subr.mxu0 0.0
        %646 = vmatpush1.msra.mxu0 0.0
        %647 = vmatprep.subr.mxu0 0.0
        %648 = vmatpush1.msra.mxu0 0.0
        %649 = vmatprep.subr.mxu0 0.0
        %650 = vmatpush1.msra.mxu0 0.0
        %651 = vmatprep.subr.mxu0 0.0
        %652 = vmatpush1.msra.mxu0 0.0
        %653 = vmatprep.subr.mxu0 0.0
        %654 = vmatpush1.msra.mxu0 0.0
        %655 = vmatprep.subr.mxu0 0.0
        %656 = vmatpush1.msra.mxu0 0.0
        %657 = vmatprep.subr.mxu0 0.0
        %658 = vmatpush1.msra.mxu0 0.0
        %659 = vmatprep.subr.mxu0 0.0
        %660 = vmatpush1.msra.mxu0 0.0
        %661 = vmatprep.subr.mxu0 0.0
        %662 = vmatpush1.msra.mxu0 0.0
        %663 = vmatprep.subr.mxu0 0.0
        %664 = vmatpush1.msra.mxu0 0.0
        %665 = vmatprep.subr.mxu0 0.0
        %666 = vmatpush1.msra.mxu0 0.0
        %667 = vmatprep.mubr.f32.mxu0 0.0
        %668 = vmatmul.mubr.f32.gmra.mrb[0].mxu0 %v494
        %v669 = vpop.f32.mrb[0].mxu0
        %v670 = vadd.f32 %v581, %v669
        %v671 = vpop.f32.mrb[0].mxu0
        %v672 = vadd.f32 %v585, %v671
        %673 = vdwg.mxu0
        %674 = vmatprep.subr.mxu0 %v499
        %675 = vmatpush1.msra.mxu0 %v498
        %676 = vmatprep.subr.mxu0 %v504
        %677 = vmatpush1.msra.mxu0 %v503
        %678 = vmatprep.subr.mxu0 %v509
        %679 = vmatpush1.msra.mxu0 %v508
        %680 = vmatprep.subr.mxu0 %v514
        %681 = vmatpush1.msra.mxu0 %v513
        %682 = vmatprep.subr.mxu0 %v519
        %683 = vmatpush1.msra.mxu0 %v518
        %684 = vmatprep.subr.mxu0 %v524
        %685 = vmatpush1.msra.mxu0 %v523
        %686 = vmatprep.subr.mxu0 %v529
        %687 = vmatpush1.msra.mxu0 %v528
        %688 = vmatprep.subr.mxu0 %v534
        %689 = vmatpush1.msra.mxu0 %v533
        %690 = vmatprep.subr.mxu0 %v539
        %691 = vmatpush1.msra.mxu0 %v538
        %692 = vmatprep.subr.mxu0 %v544
        %693 = vmatpush1.msra.mxu0 %v543
        %694 = vmatprep.subr.mxu0 %v549
        %695 = vmatpush1.msra.mxu0 %v548
        %696 = vmatprep.subr.mxu0 %v554
        %697 = vmatpush1.msra.mxu0 %v553
        %698 = vmatprep.subr.mxu0 %v559
        %699 = vmatpush1.msra.mxu0 %v558
        %700 = vmatprep.subr.mxu0 %v564
        %701 = vmatpush1.msra.mxu0 %v563
        %702 = vmatprep.subr.mxu0 %v569
        %703 = vmatpush1.msra.mxu0 %v568
        %704 = vmatprep.subr.mxu0 %v574
        %705 = vmatpush1.msra.mxu0 %v573
        %706 = vmatprep.subr.mxu0 0.0
        %707 = vmatpush1.msra.mxu0 0.0
        %708 = vmatprep.subr.mxu0 0.0
        %709 = vmatpush1.msra.mxu0 0.0
        %710 = vmatprep.subr.mxu0 0.0
        %711 = vmatpush1.msra.mxu0 0.0
        %712 = vmatprep.subr.mxu0 0.0
        %713 = vmatpush1.msra.mxu0 0.0
        %714 = vmatprep.subr.mxu0 0.0
        %715 = vmatpush1.msra.mxu0 0.0
        %716 = vmatprep.subr.mxu0 0.0
        %717 = vmatpush1.msra.mxu0 0.0
        %718 = vmatprep.subr.mxu0 0.0
        %719 = vmatpush1.msra.mxu0 0.0
        %720 = vmatprep.subr.mxu0 0.0
        %721 = vmatpush1.msra.mxu0 0.0
        %722 = vmatprep.subr.mxu0 0.0
        %723 = vmatpush1.msra.mxu0 0.0
        %724 = vmatprep.subr.mxu0 0.0
        %725 = vmatpush1.msra.mxu0 0.0
        %726 = vmatprep.subr.mxu0 0.0
        %727 = vmatpush1.msra.mxu0 0.0
        %728 = vmatprep.subr.mxu0 0.0
        %729 = vmatpush1.msra.mxu0 0.0
        %730 = vmatprep.subr.mxu0 0.0
        %731 = vmatpush1.msra.mxu0 0.0
        %732 = vmatprep.subr.mxu0 0.0
        %733 = vmatpush1.msra.mxu0 0.0
        %734 = vmatprep.subr.mxu0 0.0
        %735 = vmatpush1.msra.mxu0 0.0
        %736 = vmatprep.subr.mxu0 0.0
        %737 = vmatpush1.msra.mxu0 0.0
        %738 = vmatprep.mubr.f32.mxu0 0.0
        %739 = vmatmul.mubr.f32.gmra.mrb[0].mxu0 %v494
        %v740 = vpop.f32.mrb[0].mxu0
        %v741 = vadd.f32 %v589, %v740
        %v742 = vpop.f32.mrb[0].mxu0
        %v743 = vadd.f32 %v593, %v742
        %744 = vdwg.mxu0
        %745 = vmatprep.subr.mxu0 0.0
        %746 = vmatpush1.msra.mxu0 %v500
        %747 = vmatprep.subr.mxu0 0.0
        %748 = vmatpush1.msra.mxu0 %v505
        %749 = vmatprep.subr.mxu0 0.0
        %750 = vmatpush1.msra.mxu0 %v510
        %751 = vmatprep.subr.mxu0 0.0
        %752 = vmatpush1.msra.mxu0 %v515
        %753 = vmatprep.subr.mxu0 0.0
        %754 = vmatpush1.msra.mxu0 %v520
        %755 = vmatprep.subr.mxu0 0.0
        %756 = vmatpush1.msra.mxu0 %v525
        %757 = vmatprep.subr.mxu0 0.0
        %758 = vmatpush1.msra.mxu0 %v530
        %759 = vmatprep.subr.mxu0 0.0
        %760 = vmatpush1.msra.mxu0 %v535
        %761 = vmatprep.subr.mxu0 0.0
        %762 = vmatpush1.msra.mxu0 %v540
        %763 = vmatprep.subr.mxu0 0.0
        %764 = vmatpush1.msra.mxu0 %v545
        %765 = vmatprep.subr.mxu0 0.0
        %766 = vmatpush1.msra.mxu0 %v550
        %767 = vmatprep.subr.mxu0 0.0
        %768 = vmatpush1.msra.mxu0 %v555
        %769 = vmatprep.subr.mxu0 0.0
        %770 = vmatpush1.msra.mxu0 %v560
        %771 = vmatprep.subr.mxu0 0.0
        %772 = vmatpush1.msra.mxu0 %v565
        %773 = vmatprep.subr.mxu0 0.0
        %774 = vmatpush1.msra.mxu0 %v570
        %775 = vmatprep.subr.mxu0 0.0
        %776 = vmatpush1.msra.mxu0 %v575
        %777 = vmatprep.subr.mxu0 0.0
        %778 = vmatpush1.msra.mxu0 0.0
        %779 = vmatprep.subr.mxu0 0.0
        %780 = vmatpush1.msra.mxu0 0.0
        %781 = vmatprep.subr.mxu0 0.0
        %782 = vmatpush1.msra.mxu0 0.0
        %783 = vmatprep.subr.mxu0 0.0
        %784 = vmatpush1.msra.mxu0 0.0
        %785 = vmatprep.subr.mxu0 0.0
        %786 = vmatpush1.msra.mxu0 0.0
        %787 = vmatprep.subr.mxu0 0.0
        %788 = vmatpush1.msra.mxu0 0.0
        %789 = vmatprep.subr.mxu0 0.0
        %790 = vmatpush1.msra.mxu0 0.0
        %791 = vmatprep.subr.mxu0 0.0
        %792 = vmatpush1.msra.mxu0 0.0
        %793 = vmatprep.subr.mxu0 0.0
        %794 = vmatpush1.msra.mxu0 0.0
        %795 = vmatprep.subr.mxu0 0.0
        %796 = vmatpush1.msra.mxu0 0.0
        %797 = vmatprep.subr.mxu0 0.0
        %798 = vmatpush1.msra.mxu0 0.0
        %799 = vmatprep.subr.mxu0 0.0
        %800 = vmatpush1.msra.mxu0 0.0
        %801 = vmatprep.subr.mxu0 0.0
        %802 = vmatpush1.msra.mxu0 0.0
        %803 = vmatprep.subr.mxu0 0.0
        %804 = vmatpush1.msra.mxu0 0.0
        %805 = vmatprep.subr.mxu0 0.0
        %806 = vmatpush1.msra.mxu0 0.0
        %807 = vmatprep.subr.mxu0 0.0
        %808 = vmatpush1.msra.mxu0 0.0
        %809 = vmatprep.mubr.f32.mxu0 0.0
        %810 = vmatmul.mubr.f32.gmra.mrb[0].mxu0 %v494
        %v811 = vpop.f32.mrb[0].mxu0
        %v812 = vadd.f32 %v597, %v811
        %v813 = vpop.f32.mrb[0].mxu0
        %814 = vdwg.mxu0
        %v815 = vmax.f32 %v670, %v812
        %v816 = vmax.f32 %v815, %v672
        %v817 = vmax.f32 %v741, %v743
        %v818 = vmax.f32 %v816, %v817
        %819 = vmax.xlane.f32.xlu0 %v818
        %v820 = vpop.xlane.xlu0 %819
        %v821 = vsub.f32 %v670, %v820
        %v822 = vsub.f32 %v672, %v820
        %v823 = vsub.f32 %v741, %v820
        %v824 = vsub.f32 %v743, %v820
        %v825 = vsub.f32 %v812, %v820
        %v826 = vmul.f32 %v821, 1.442695
        %v827 = vpow.pop %v826
        %v828 = vmul.f32 %v822, 1.442695
        %v829 = vpow.pop %v828
        %v830 = vmul.f32 %v823, 1.442695
        %v831 = vpow.pop %v830
        %v832 = vmul.f32 %v824, 1.442695
        %v833 = vpow.pop %v832
        %v834 = vmul.f32 %v825, 1.442695
        %v835 = vpow.pop %v834
        %v836 = vadd.f32 %v827, %v829
        %v837 = vadd.f32 %v836, %v831
        %v838 = vadd.f32 %v837, %v833
        %v839 = vadd.f32 %v838, %v835
        %840 = vadd.xlane.f32.xlu0 %v839
        %v841 = vpop.xlane.xlu0 %840
        %v842 = vrcp.pop %v841
        %v843 = vmul.f32 %v827, %v842
        %v844 = vmul.f32 %v829, %v842
        %v845 = vmul.f32 %v831, %v842
        %v846 = vmul.f32 %v833, %v842
        %v847 = vmul.f32 %v835, %v842
        %848 = vst [vmem:[%s242] sm:$0xff] %v843
        %849 = vst [vmem:[%s242 + $0x8] sm:$0xff] %v844
        %850 = vst [vmem:[%s242 + $0x10] sm:$0xff] %v845
        %851 = vst [vmem:[%s242 + $0x18] sm:$0xff] %v846
        %852 = vst [vmem:[%s242 + $0x20] sm:$0xff] %v847
        %s853 = sand.u32 %s123, 1
        %s854 = scalar_lea.sflag [#allocation8], %s853
        %s855 = sand.u32 %s123, 1
        %s856 = smul.addr %s855, 40
        %s857 = scalar_lea.vmem [#allocation11], %s856
        %s858 = sand.u32 %s149, 1
        %s859 = scalar_lea.sflag [#allocation13], %s858
        %s860 = sand.u32 %s149, 1
        %s861 = smul.addr %s860, 8
        %s862 = scalar_lea.vmem [#allocation12], %s861
        // Predicated region
        $region77: #{tpu_custom_call.1} parent=35 // pred_check
          %p863 = pneg %p133
        $region78: #{tpu_custom_call.1} parent=35 // pred_check_branch
          %865 = sbr.rel (%p863) target = $region80
        $region79: #{tpu_custom_call.1} parent=35 // pred_region
          %s867 = ssub.s32 640, 640
          %868 = vsyncadd %s854, %s867
          %s869 = smul.addr %s31, 5
          %s870 = smul.addr %s869, 128
          %s871 = scalar_lea.hbm %s6, %s870
          %s873 = sshll.u32 %s857, 4
          %s874 = int_to_ptr.vmem [resolvable:$true] %s873
          %876 = dma.vmem_to_hbm [thread:$0]  %s874, 640, %s871, %s854
        $region80: #{tpu_custom_call.1} parent=35 // pred_fallthru
          _
        // Predicated region
        $region81: #{tpu_custom_call.1} parent=35 // pred_check
          %p877 = pneg %p159
        $region82: #{tpu_custom_call.1} parent=35 // pred_check_branch
          %879 = sbr.rel (%p877) target = $region84
        $region83: #{tpu_custom_call.1} parent=35 // pred_region
          %s881 = ssub.s32 128, 128
          %882 = vsyncadd %s859, %s881
          %s883 = smul.addr %s31, 128
          %s884 = scalar_lea.hbm %s7, %s883
          %s886 = sshll.u32 %s862, 4
          %s887 = int_to_ptr.vmem [resolvable:$true] %s886
          %889 = dma.vmem_to_hbm [thread:$0]  %s887, 128, %s884, %s859
        $region84: #{tpu_custom_call.1} parent=35 // pred_fallthru
          _
      $region36: #{tpu_custom_call.1} parent=5 // pred_fallthru
        _
      %p890 = scmp.le.s32.totalorder 2, %s26
      // Predicated region
      $region85: #{tpu_custom_call.1} parent=5 // pred_check
        %p891 = pneg %p890
      $region86: #{tpu_custom_call.1} parent=5 // pred_check_branch
        %893 = sbr.rel (%p891) target = $region88
      $region87: #{tpu_custom_call.1} parent=5 // pred_region
        %s894 = ssub.s32 %s26, 2
        // Predicated region
        $region89: #{tpu_custom_call.1} parent=87 // pred_check
          %p895 = pneg %p139
        $region90: #{tpu_custom_call.1} parent=87 // pred_check_branch
          %897 = sbr.rel (%p895) target = $region92
        $region91: #{tpu_custom_call.1} parent=87 // pred_region
          %s898 = sand.u32 %s124, 1
          %s899 = scalar_lea.sflag [#allocation8], %s898
          %s900 = sand.u32 %s124, 1
          %s901 = smul.addr %s900, 40
          %s902 = scalar_lea.vmem [#allocation11], %s901
          %903 = dma.done %s899, 640
        $region92: #{tpu_custom_call.1} parent=87 // pred_fallthru
          _
        // Predicated region
        $region93: #{tpu_custom_call.1} parent=87 // pred_check
          %p904 = pneg %p165
        $region94: #{tpu_custom_call.1} parent=87 // pred_check_branch
          %906 = sbr.rel (%p904) target = $region96
        $region95: #{tpu_custom_call.1} parent=87 // pred_region
          %s907 = sand.u32 %s150, 1
          %s908 = scalar_lea.sflag [#allocation13], %s907
          %s909 = sand.u32 %s150, 1
          %s910 = smul.addr %s909, 8
          %s911 = scalar_lea.vmem [#allocation12], %s910
          %912 = dma.done %s908, 128
        $region96: #{tpu_custom_call.1} parent=87 // pred_fallthru
          _
      $region88: #{tpu_custom_call.1} parent=5 // pred_fallthru
        _
    $region6: #{tpu_custom_call.1} parent=1 // loop_footer
      %s30 = sadd.s32 1, %s26
    $region7: #{tpu_custom_call.1} parent=1 // loop_footer_branch
      %25 = sbr.rel target = $region3
    $region8: #{tpu_custom_call.1} parent=1 // loop_exit
      _
    %913 = vsyncpa [#allocation7], 1
    %s914 = scalar_lea.sflag [#allocation7], 1
    %915 = vsyncpa %s914, 1
    %916 = vsyncpa [#allocation10], 1
    %917 = vsyncpa [#allocation8], 1
    %s918 = scalar_lea.sflag [#allocation8], 1
    %919 = vsyncpa %s918, 1
    %920 = vsyncpa [#allocation13], 1
    %s921 = scalar_lea.sflag [#allocation13], 1
    %922 = vsyncpa %s921, 1
  %923 = vsyncmov [#allocation3]
  %s924 = vpop.sfrf %923
  %p925 = scmp.eq.s32.totalorder %s924, 0
  %p926 = pneg %p925
  %928 = shalt.err (%p926)
  %s929 = scalar_lea.sflag [#allocation3], 1
  %930 = vsyncmov %s929
  %s931 = vpop.sfrf %930
  %p932 = scmp.eq.s32.totalorder %s931, 0
  %p933 = pneg %p932
  %935 = shalt.err (%p933)
  %s936 = scalar_lea.sflag [#allocation3], 2
  %937 = vsyncmov %s936
  %s938 = vpop.sfrf %937
  %p939 = scmp.eq.s32.totalorder %s938, 0
  %p940 = pneg %p939
  %942 = shalt.err (%p940)
  %s943 = scalar_lea.sflag [#allocation3], 3
  %944 = vsyncmov %s943
  %s945 = vpop.sfrf %944
  %p946 = scmp.eq.s32.totalorder %s945, 0
  %p947 = pneg %p946
  %949 = shalt.err (%p947)
  %s950 = scalar_lea.sflag [#allocation3], 4
  %951 = vsyncmov %s950
  %s952 = vpop.sfrf %951
  %p953 = scmp.eq.s32.totalorder %s952, 0
  %p954 = pneg %p953
  %956 = shalt.err (%p954)
  %s957 = scalar_lea.sflag [#allocation3], 5
  %958 = vsyncmov %s957
  %s959 = vpop.sfrf %958
  %p960 = scmp.eq.s32.totalorder %s959, 0
  %p961 = pneg %p960
  %963 = shalt.err (%p961)
  %s964 = scalar_lea.sflag [#allocation3], 6
  %965 = vsyncmov %s964
  %s966 = vpop.sfrf %965
  %p967 = scmp.eq.s32.totalorder %s966, 0
  %p968 = pneg %p967
  %970 = shalt.err (%p968)
  %s971 = scalar_lea.sflag [#allocation3], 7
  %972 = vsyncmov %s971
  %s973 = vpop.sfrf %972
  %p974 = scmp.eq.s32.totalorder %s973, 0
  %p975 = pneg %p974
  %977 = shalt.err (%p975)

</llo_original>
